<compile_context>
chip_gen: v6e
topology: v6e:2x2x1
jax: 0.10.0
libtpu: 0.0.40
codegen_flags: <defaults>
</compile_context>

<pallas_src>
import functools

import jax
import jax.numpy as jnp
from jax import lax
from jax.experimental import pallas as pl
from jax.experimental.pallas import tpu as pltpu


def _ppeg_kernel(x_ref, w_ref, b_ref, o_ref, xpad_ref, *, H, W, SH):
    # x_ref / o_ref : (1, N, CT) with N = 2 + H*W (tokens 0,1 pass through)
    # w_ref         : (7, 7, CT) fused depthwise weights (7x7 + 5x5 + 3x3 + identity)
    # b_ref         : (1, CT)    fused bias
    # xpad_ref      : (H+6, W+16, CT) VMEM scratch, interior at [3:3+H, 8:8+W]
    C = o_ref.shape[2]

    # ---- tokens 0,1 pass straight through ---------------------------------
    o_ref[:, 0:2, :] = x_ref[:, 0:2, :]

    # ---- zero ONLY the halo strips (interior is overwritten right after) --
    xpad_ref[:, 0:8, :] = jnp.zeros((H + 6, 8, C), xpad_ref.dtype)
    xpad_ref[:, 8 + W:, :] = jnp.zeros((H + 6, 8, C), xpad_ref.dtype)
    xpad_ref[0:3, 8:8 + W, :] = jnp.zeros((3, W, C), xpad_ref.dtype)
    xpad_ref[3 + H:, 8:8 + W, :] = jnp.zeros((3, W, C), xpad_ref.dtype)

    # ---- copy feature rows into the padded interior (row-wise, no reshape) -
    def copy_row(h, carry):
        xpad_ref[pl.ds(3 + h, 1), 8:8 + W, :] = \
            x_ref[pl.ds(0, 1), pl.ds(2 + h * W, W), :]
        return carry

    if H <= 8:
        for h in range(H):
            copy_row(h, 0)
    else:
        lax.fori_loop(0, H, copy_row, 0)

    # ---- fused 7x7 depthwise conv, strip-by-strip in registers ------------
    bias = b_ref[0].astype(jnp.float32)            # (CT,)

    def strip(r0, sh):
        acc = jnp.broadcast_to(bias, (sh, W, C)).astype(jnp.float32)
        for dx in range(7):
            for dy in range(7):
                tap = xpad_ref[pl.ds(r0 + dy, sh), pl.ds(5 + dx, W), :]
                acc = acc + tap.astype(jnp.float32) * w_ref[dy, dx, :]
        # store the strip back into the token layout (row h -> token 2 + h*W)
        for r in range(sh):
            o_ref[pl.ds(0, 1), pl.ds(2 + (r0 + r) * W, W), :] = \
                acc[r:r + 1].astype(o_ref.dtype)

    n_full = H // SH
    tail = H % SH
    if n_full > 0:
        if n_full <= 4:
            for s in range(n_full):
                strip(s * SH, SH)
        else:
            def body(s, carry):
                strip(s * SH, SH)
                return carry
            lax.fori_loop(0, n_full, body, 0)
    if tail > 0:
        strip(n_full * SH, tail)


def _ppeg_pallas(x, w, b, H, W):
    """x: (B, N, Cp) with Cp % 128 == 0, w: (7,7,Cp), b: (1,Cp)."""
    B, N, Cp = x.shape
    itemsize = jnp.dtype(x.dtype).itemsize

    # per-channel VMEM footprint: double-buffered in/out blocks + weights/bias + scratch
    per_ct = (itemsize * 2 * N            # x block, double-buffered
              + itemsize * 2 * N          # out block, double-buffered
              + 4 * (2 * 49 + 2)          # weights + bias (f32), double-buffered
              + itemsize * (H + 6) * (W + 16))   # zero-halo scratch

    budget = 40 * 1024 * 1024             # conservative: fits v7x 64 MiB as well
    CT = 128
    t = 128
    while t <= Cp:
        if Cp % t == 0 and t * per_ct <= budget:
            CT = t
        t += 128
    n_c = Cp // CT

    # v7x has 2 TensorCores: make sure the parallel grid has >= 2 steps when possible.
    if B * n_c < 2 and Cp >= 256:
        t = CT - 128
        while t >= 128:
            if Cp % t == 0:
                CT = t
                break
            t -= 128
        n_c = Cp // CT

    footprint = per_ct * CT
    vmem_limit = int(min(max(footprint * 1.3, 32 * 1024 * 1024), 60 * 1024 * 1024))

    # strip height: keep the f32 accumulator (SH, W, CT) comfortably in vregs
    SH = max(1, min(8, (16 * 1024) // max(1, W * CT)))

    kernel = functools.partial(_ppeg_kernel, H=H, W=W, SH=SH)

    return pl.pallas_call(
        kernel,
        out_shape=jax.ShapeDtypeStruct((B, N, Cp), x.dtype),
        grid_spec=pltpu.PrefetchScalarGridSpec(
            num_scalar_prefetch=0,
            grid=(B, n_c),
            in_specs=[
                pl.BlockSpec((1, N, CT), lambda bb, cc: (bb, 0, cc)),
                pl.BlockSpec((7, 7, CT), lambda bb, cc: (0, 0, cc)),
                pl.BlockSpec((1, CT), lambda bb, cc: (0, cc)),
            ],
            out_specs=pl.BlockSpec((1, N, CT), lambda bb, cc: (bb, 0, cc)),
            scratch_shapes=[pltpu.VMEM((H + 6, W + 16, CT), x.dtype)],
        ),
        compiler_params=pltpu.CompilerParams(
            dimension_semantics=("parallel", "parallel"),
            vmem_limit_bytes=vmem_limit,
        ),
    )(x, w, b)


def _fuse_ppeg_weights(params):
    """Fuse 7x7 + 5x5 + 3x3 depthwise kernels + identity into one 7x7 kernel & bias."""
    w = params["w7"].astype(jnp.float32)
    w = w.at[1:6, 1:6, :].add(params["w5"].astype(jnp.float32))
    w = w.at[2:5, 2:5, :].add(params["w3"].astype(jnp.float32))
    w = w.at[3, 3, :].add(1.0)                      # the "+ cnn_feat" identity term
    b = (params["b7"] + params["b5"] + params["b3"]).astype(jnp.float32)
    return w, b


def ppeg_forward(x, H, W, params):
    """x: (B, 2 + H*W, C). Returns (B, 2 + H*W, C)."""
    B, N, C = x.shape
    assert N == 2 + H * W

    w_comb, b_comb = _fuse_ppeg_weights(params)     # (7,7,C), (1,C)

    # Lane-density guard: pad channels to a multiple of 128 (avoids masked vst.msk).
    Cp = max(128, ((C + 127) // 128) * 128)
    if Cp != C:
        pad = Cp - C
        x_in = jnp.pad(x, ((0, 0), (0, 0), (0, pad)))
        w_in = jnp.pad(w_comb, ((0, 0), (0, 0), (0, pad)))
        b_in = jnp.pad(b_comb, ((0, 0), (0, pad)))
    else:
        x_in, w_in, b_in = x, w_comb, b_comb

    out = _ppeg_pallas(x_in, w_in, b_in, H, W)
    if Cp != C:
        out = out[:, :, :C]
    return out


def init_ppeg_params(key, dim):
    """Deterministic synthetic init. PyTorch weights are (dim,1,k,k); stored here as (k,k,dim)."""
    ks = jax.random.split(key, 6)

    def w(k, ksz):
        bound = 1.0 / (ksz * ksz) ** 0.5
        return jax.random.uniform(k, (ksz, ksz, dim), jnp.float32, -bound, bound)

    def b(k, ksz):
        bound = 1.0 / (ksz * ksz) ** 0.5
        return jax.random.uniform(k, (1, dim), jnp.float32, -bound, bound)

    return {
        "w7": w(ks[0], 7), "b7": b(ks[1], 7),
        "w5": w(ks[2], 5), "b5": b(ks[3], 5),
        "w3": w(ks[4], 3), "b3": b(ks[5], 3),
    }


if __name__ == "__main__":
    B, dim, H, W = 2, 128, 8, 8
    N = 2 + H * W

    key = jax.random.PRNGKey(0)
    kx, kp = jax.random.split(key)
    x = jax.random.normal(kx, (B, N, dim), jnp.float32)
    params = init_ppeg_params(kp, dim)

    out = ppeg_forward(x, H, W, params)
    out = jax.block_until_ready(out)
    assert out.shape == (B, N, dim), out.shape

    # sanity vs. pure-JAX reference (depthwise convs via lax.conv_general_dilated);
    # fp summation order differs (fused kernel), so use a tolerance, not exact equality.
    def ref(x, H, W, p):
        B, N, C = x.shape
        feat = x[:, 2:, :].reshape(B, H, W, C)

        def dwconv(f, w, b, k):
            wk = w.reshape(k, k, 1, C)
            y = jax.lax.conv_general_dilated(
                f, wk, window_strides=(1, 1), padding="SAME",
                dimension_numbers=("NHWC", "HWIO", "NHWC"),
                feature_group_count=C)
            return y + b[0]

        s = dwconv(feat, p["w7"], p["b7"], 7) + feat \
            + dwconv(feat, p["w5"], p["b5"], 5) + dwconv(feat, p["w3"], p["b3"], 3)
        return jnp.concatenate([x[:, 0:1], x[:, 1:2], s.reshape(B, H * W, C)], axis=1)

    ref_out = ref(x, H, W, params)
    assert jnp.allclose(out, ref_out, atol=1e-4, rtol=1e-4), \
        float(jnp.max(jnp.abs(out - ref_out)))

    print("KERNEL_OK")
</pallas_src>

<mosaic_0001>
module attributes {stable_mosaic.version = 11 : i64} {
  func.func @_ppeg_kernel(%arg0: i32, %arg1: i32, %arg2: memref<1x66x128xf32, #tpu.memory_space<vmem>>, %arg3: memref<7x7x128xf32, #tpu.memory_space<vmem>>, %arg4: memref<1x128xf32, #tpu.memory_space<vmem>>, %arg5: memref<1x66x128xf32, #tpu.memory_space<vmem>>, %arg6: memref<14x24x128xf32, #tpu.memory_space<vmem>>) attributes {dimension_semantics = [#tpu.dimension_semantics<parallel>, #tpu.dimension_semantics<parallel>], iteration_bounds = array<i64: 2, 1>, scalar_prefetch = 0 : i64, scratch_operands = 1 : i64, tpu.core_type = #tpu.core_type<tc>, window_params = [{transform_indices = @transform_0, window_bounds = array<i64: 1, 66, 128>}, {transform_indices = @transform_1, window_bounds = array<i64: 7, 7, 128>}, {transform_indices = @transform_2, window_bounds = array<i64: 1, 128>}, {transform_indices = @transform_3, window_bounds = array<i64: 1, 66, 128>}]} {
    %c0 = arith.constant 0 : index
    %c0_0 = arith.constant 0 : index
    %c0_1 = arith.constant 0 : index
    %0 = vector.load %arg2[%c0, %c0_0, %c0_1] : memref<1x66x128xf32, #tpu.memory_space<vmem>>, vector<1x2x128xf32>
    %c0_2 = arith.constant 0 : index
    %c0_3 = arith.constant 0 : index
    %c0_4 = arith.constant 0 : index
    %1 = vector.load %arg5[%c0_2, %c0_3, %c0_4] : memref<1x66x128xf32, #tpu.memory_space<vmem>>, vector<1x2x128xf32>
    tpu.vector_store %arg5[%c0_2, %c0_3, %c0_4], %0 {strides = array<i32>} : memref<1x66x128xf32, #tpu.memory_space<vmem>>, vector<1x2x128xf32>,
    %cst = arith.constant 0.000000e+00 : f32
    %2 = vector.broadcast %cst : f32 to vector<14x8x128xf32>
    %c0_5 = arith.constant 0 : index
    %c0_6 = arith.constant 0 : index
    %c0_7 = arith.constant 0 : index
    %3 = vector.load %arg6[%c0_5, %c0_6, %c0_7] : memref<14x24x128xf32, #tpu.memory_space<vmem>>, vector<14x8x128xf32>
    tpu.vector_store %arg6[%c0_5, %c0_6, %c0_7], %2 {strides = array<i32>} : memref<14x24x128xf32, #tpu.memory_space<vmem>>, vector<14x8x128xf32>,
    %cst_8 = arith.constant 0.000000e+00 : f32
    %4 = vector.broadcast %cst_8 : f32 to vector<14x8x128xf32>
    %c0_9 = arith.constant 0 : index
    %c16 = arith.constant 16 : index
    %c0_10 = arith.constant 0 : index
    %5 = vector.load %arg6[%c0_9, %c16, %c0_10] : memref<14x24x128xf32, #tpu.memory_space<vmem>>, vector<14x8x128xf32>
    tpu.vector_store %arg6[%c0_9, %c16, %c0_10], %4 {strides = array<i32>} : memref<14x24x128xf32, #tpu.memory_space<vmem>>, vector<14x8x128xf32>,
    %cst_11 = arith.constant 0.000000e+00 : f32
    %6 = vector.broadcast %cst_11 : f32 to vector<3x8x128xf32>
    %c0_12 = arith.constant 0 : index
    %c8 = arith.constant 8 : index
    %c0_13 = arith.constant 0 : index
    %7 = vector.load %arg6[%c0_12, %c8, %c0_13] : memref<14x24x128xf32, #tpu.memory_space<vmem>>, vector<3x8x128xf32>
    tpu.vector_store %arg6[%c0_12, %c8, %c0_13], %6 {strides = array<i32>} : memref<14x24x128xf32, #tpu.memory_space<vmem>>, vector<3x8x128xf32>,
    %cst_14 = arith.constant 0.000000e+00 : f32
    %8 = vector.broadcast %cst_14 : f32 to vector<3x8x128xf32>
    %c11 = arith.constant 11 : index
    %c8_15 = arith.constant 8 : index
    %c0_16 = arith.constant 0 : index
    %9 = vector.load %arg6[%c11, %c8_15, %c0_16] : memref<14x24x128xf32, #tpu.memory_space<vmem>>, vector<3x8x128xf32>
    tpu.vector_store %arg6[%c11, %c8_15, %c0_16], %8 {strides = array<i32>} : memref<14x24x128xf32, #tpu.memory_space<vmem>>, vector<3x8x128xf32>,
    %c0_17 = arith.constant 0 : index
    %c2 = arith.constant 2 : index
    %c0_18 = arith.constant 0 : index
    %10 = vector.load %arg2[%c0_17, %c2, %c0_18] : memref<1x66x128xf32, #tpu.memory_space<vmem>>, vector<1x8x128xf32>
    %c3 = arith.constant 3 : index
    %c8_19 = arith.constant 8 : index
    %c0_20 = arith.constant 0 : index
    %11 = vector.load %arg6[%c3, %c8_19, %c0_20] : memref<14x24x128xf32, #tpu.memory_space<vmem>>, vector<1x8x128xf32>
    tpu.vector_store %arg6[%c3, %c8_19, %c0_20], %10 {strides = array<i32>} : memref<14x24x128xf32, #tpu.memory_space<vmem>>, vector<1x8x128xf32>,
    %c0_21 = arith.constant 0 : index
    %c10 = arith.constant 10 : index
    %c0_22 = arith.constant 0 : index
    %12 = vector.load %arg2[%c0_21, %c10, %c0_22] : memref<1x66x128xf32, #tpu.memory_space<vmem>>, vector<1x8x128xf32>
    %c4 = arith.constant 4 : index
    %c8_23 = arith.constant 8 : index
    %c0_24 = arith.constant 0 : index
    %13 = vector.load %arg6[%c4, %c8_23, %c0_24] : memref<14x24x128xf32, #tpu.memory_space<vmem>>, vector<1x8x128xf32>
    tpu.vector_store %arg6[%c4, %c8_23, %c0_24], %12 {strides = array<i32>} : memref<14x24x128xf32, #tpu.memory_space<vmem>>, vector<1x8x128xf32>,
    %c0_25 = arith.constant 0 : index
    %c18 = arith.constant 18 : index
    %c0_26 = arith.constant 0 : index
    %14 = vector.load %arg2[%c0_25, %c18, %c0_26] : memref<1x66x128xf32, #tpu.memory_space<vmem>>, vector<1x8x128xf32>
    %c5 = arith.constant 5 : index
    %c8_27 = arith.constant 8 : index
    %c0_28 = arith.constant 0 : index
    %15 = vector.load %arg6[%c5, %c8_27, %c0_28] : memref<14x24x128xf32, #tpu.memory_space<vmem>>, vector<1x8x128xf32>
    tpu.vector_store %arg6[%c5, %c8_27, %c0_28], %14 {strides = array<i32>} : memref<14x24x128xf32, #tpu.memory_space<vmem>>, vector<1x8x128xf32>,
    %c0_29 = arith.constant 0 : index
    %c26 = arith.constant 26 : index
    %c0_30 = arith.constant 0 : index
    %16 = vector.load %arg2[%c0_29, %c26, %c0_30] : memref<1x66x128xf32, #tpu.memory_space<vmem>>, vector<1x8x128xf32>
    %c6 = arith.constant 6 : index
    %c8_31 = arith.constant 8 : index
    %c0_32 = arith.constant 0 : index
    %17 = vector.load %arg6[%c6, %c8_31, %c0_32] : memref<14x24x128xf32, #tpu.memory_space<vmem>>, vector<1x8x128xf32>
    tpu.vector_store %arg6[%c6, %c8_31, %c0_32], %16 {strides = array<i32>} : memref<14x24x128xf32, #tpu.memory_space<vmem>>, vector<1x8x128xf32>,
    %c0_33 = arith.constant 0 : index
    %c34 = arith.constant 34 : index
    %c0_34 = arith.constant 0 : index
    %18 = vector.load %arg2[%c0_33, %c34, %c0_34] : memref<1x66x128xf32, #tpu.memory_space<vmem>>, vector<1x8x128xf32>
    %c7 = arith.constant 7 : index
    %c8_35 = arith.constant 8 : index
    %c0_36 = arith.constant 0 : index
    %19 = vector.load %arg6[%c7, %c8_35, %c0_36] : memref<14x24x128xf32, #tpu.memory_space<vmem>>, vector<1x8x128xf32>
    tpu.vector_store %arg6[%c7, %c8_35, %c0_36], %18 {strides = array<i32>} : memref<14x24x128xf32, #tpu.memory_space<vmem>>, vector<1x8x128xf32>,
    %c0_37 = arith.constant 0 : index
    %c42 = arith.constant 42 : index
    %c0_38 = arith.constant 0 : index
    %20 = vector.load %arg2[%c0_37, %c42, %c0_38] : memref<1x66x128xf32, #tpu.memory_space<vmem>>, vector<1x8x128xf32>
    %c8_39 = arith.constant 8 : index
    %c8_40 = arith.constant 8 : index
    %c0_41 = arith.constant 0 : index
    %21 = vector.load %arg6[%c8_39, %c8_40, %c0_41] : memref<14x24x128xf32, #tpu.memory_space<vmem>>, vector<1x8x128xf32>
    tpu.vector_store %arg6[%c8_39, %c8_40, %c0_41], %20 {strides = array<i32>} : memref<14x24x128xf32, #tpu.memory_space<vmem>>, vector<1x8x128xf32>,
    %c0_42 = arith.constant 0 : index
    %c50 = arith.constant 50 : index
    %c0_43 = arith.constant 0 : index
    %22 = vector.load %arg2[%c0_42, %c50, %c0_43] : memref<1x66x128xf32, #tpu.memory_space<vmem>>, vector<1x8x128xf32>
    %c9 = arith.constant 9 : index
    %c8_44 = arith.constant 8 : index
    %c0_45 = arith.constant 0 : index
    %23 = vector.load %arg6[%c9, %c8_44, %c0_45] : memref<14x24x128xf32, #tpu.memory_space<vmem>>, vector<1x8x128xf32>
    tpu.vector_store %arg6[%c9, %c8_44, %c0_45], %22 {strides = array<i32>} : memref<14x24x128xf32, #tpu.memory_space<vmem>>, vector<1x8x128xf32>,
    %c0_46 = arith.constant 0 : index
    %c58 = arith.constant 58 : index
    %c0_47 = arith.constant 0 : index
    %24 = vector.load %arg2[%c0_46, %c58, %c0_47] : memref<1x66x128xf32, #tpu.memory_space<vmem>>, vector<1x8x128xf32>
    %c10_48 = arith.constant 10 : index
    %c8_49 = arith.constant 8 : index
    %c0_50 = arith.constant 0 : index
    %25 = vector.load %arg6[%c10_48, %c8_49, %c0_50] : memref<14x24x128xf32, #tpu.memory_space<vmem>>, vector<1x8x128xf32>
    tpu.vector_store %arg6[%c10_48, %c8_49, %c0_50], %24 {strides = array<i32>} : memref<14x24x128xf32, #tpu.memory_space<vmem>>, vector<1x8x128xf32>,
    %c0_51 = arith.constant 0 : index
    %c0_52 = arith.constant 0 : index
    %26 = vector.load %arg4[%c0_51, %c0_52] : memref<1x128xf32, #tpu.memory_space<vmem>>, vector<1x128xf32>
    %27 = vector.shape_cast %26 : vector<1x128xf32> to vector<128xf32>
    %28 = vector.shape_cast %27 : vector<128xf32> to vector<1x1x128xf32>
    %29 = vector.broadcast %28 : vector<1x1x128xf32> to vector<8x8x128xf32>
    %c0_53 = arith.constant 0 : index
    %c5_54 = arith.constant 5 : index
    %c0_55 = arith.constant 0 : index
    %30 = vector.load %arg6[%c0_53, %c5_54, %c0_55] : memref<14x24x128xf32, #tpu.memory_space<vmem>>, vector<8x8x128xf32>
    %c0_56 = arith.constant 0 : index
    %c0_57 = arith.constant 0 : index
    %c0_58 = arith.constant 0 : index
    %31 = vector.load %arg3[%c0_56, %c0_57, %c0_58] : memref<7x7x128xf32, #tpu.memory_space<vmem>>, vector<1x1x128xf32>
    %32 = vector.shape_cast %31 : vector<1x1x128xf32> to vector<128xf32>
    %33 = vector.shape_cast %32 : vector<128xf32> to vector<1x1x128xf32>
    %34 = vector.broadcast %33 : vector<1x1x128xf32> to vector<8x8x128xf32>
    %35 = arith.mulf %30, %34 : vector<8x8x128xf32>
    %36 = arith.addf %29, %35 : vector<8x8x128xf32>
    %c1 = arith.constant 1 : index
    %c5_59 = arith.constant 5 : index
    %c0_60 = arith.constant 0 : index
    %37 = vector.load %arg6[%c1, %c5_59, %c0_60] : memref<14x24x128xf32, #tpu.memory_space<vmem>>, vector<8x8x128xf32>
    %c1_61 = arith.constant 1 : index
    %c0_62 = arith.constant 0 : index
    %c0_63 = arith.constant 0 : index
    %38 = vector.load %arg3[%c1_61, %c0_62, %c0_63] : memref<7x7x128xf32, #tpu.memory_space<vmem>>, vector<1x1x128xf32>
    %39 = vector.shape_cast %38 : vector<1x1x128xf32> to vector<128xf32>
    %40 = vector.shape_cast %39 : vector<128xf32> to vector<1x1x128xf32>
    %41 = vector.broadcast %40 : vector<1x1x128xf32> to vector<8x8x128xf32>
    %42 = arith.mulf %37, %41 : vector<8x8x128xf32>
    %43 = arith.addf %36, %42 : vector<8x8x128xf32>
    %c2_64 = arith.constant 2 : index
    %c5_65 = arith.constant 5 : index
    %c0_66 = arith.constant 0 : index
    %44 = vector.load %arg6[%c2_64, %c5_65, %c0_66] : memref<14x24x128xf32, #tpu.memory_space<vmem>>, vector<8x8x128xf32>
    %c2_67 = arith.constant 2 : index
    %c0_68 = arith.constant 0 : index
    %c0_69 = arith.constant 0 : index
    %45 = vector.load %arg3[%c2_67, %c0_68, %c0_69] : memref<7x7x128xf32, #tpu.memory_space<vmem>>, vector<1x1x128xf32>
    %46 = vector.shape_cast %45 : vector<1x1x128xf32> to vector<128xf32>
    %47 = vector.shape_cast %46 : vector<128xf32> to vector<1x1x128xf32>
    %48 = vector.broadcast %47 : vector<1x1x128xf32> to vector<8x8x128xf32>
    %49 = arith.mulf %44, %48 : vector<8x8x128xf32>
    %50 = arith.addf %43, %49 : vector<8x8x128xf32>
    %c3_70 = arith.constant 3 : index
    %c5_71 = arith.constant 5 : index
    %c0_72 = arith.constant 0 : index
    %51 = vector.load %arg6[%c3_70, %c5_71, %c0_72] : memref<14x24x128xf32, #tpu.memory_space<vmem>>, vector<8x8x128xf32>
    %c3_73 = arith.constant 3 : index
    %c0_74 = arith.constant 0 : index
    %c0_75 = arith.constant 0 : index
    %52 = vector.load %arg3[%c3_73, %c0_74, %c0_75] : memref<7x7x128xf32, #tpu.memory_space<vmem>>, vector<1x1x128xf32>
    %53 = vector.shape_cast %52 : vector<1x1x128xf32> to vector<128xf32>
    %54 = vector.shape_cast %53 : vector<128xf32> to vector<1x1x128xf32>
    %55 = vector.broadcast %54 : vector<1x1x128xf32> to vector<8x8x128xf32>
    %56 = arith.mulf %51, %55 : vector<8x8x128xf32>
    %57 = arith.addf %50, %56 : vector<8x8x128xf32>
    %c4_76 = arith.constant 4 : index
    %c5_77 = arith.constant 5 : index
    %c0_78 = arith.constant 0 : index
    %58 = vector.load %arg6[%c4_76, %c5_77, %c0_78] : memref<14x24x128xf32, #tpu.memory_space<vmem>>, vector<8x8x128xf32>
    %c4_79 = arith.constant 4 : index
    %c0_80 = arith.constant 0 : index
    %c0_81 = arith.constant 0 : index
    %59 = vector.load %arg3[%c4_79, %c0_80, %c0_81] : memref<7x7x128xf32, #tpu.memory_space<vmem>>, vector<1x1x128xf32>
    %60 = vector.shape_cast %59 : vector<1x1x128xf32> to vector<128xf32>
    %61 = vector.shape_cast %60 : vector<128xf32> to vector<1x1x128xf32>
    %62 = vector.broadcast %61 : vector<1x1x128xf32> to vector<8x8x128xf32>
    %63 = arith.mulf %58, %62 : vector<8x8x128xf32>
    %64 = arith.addf %57, %63 : vector<8x8x128xf32>
    %c5_82 = arith.constant 5 : index
    %c5_83 = arith.constant 5 : index
    %c0_84 = arith.constant 0 : index
    %65 = vector.load %arg6[%c5_82, %c5_83, %c0_84] : memref<14x24x128xf32, #tpu.memory_space<vmem>>, vector<8x8x128xf32>
    %c5_85 = arith.constant 5 : index
    %c0_86 = arith.constant 0 : index
    %c0_87 = arith.constant 0 : index
    %66 = vector.load %arg3[%c5_85, %c0_86, %c0_87] : memref<7x7x128xf32, #tpu.memory_space<vmem>>, vector<1x1x128xf32>
    %67 = vector.shape_cast %66 : vector<1x1x128xf32> to vector<128xf32>
    %68 = vector.shape_cast %67 : vector<128xf32> to vector<1x1x128xf32>
    %69 = vector.broadcast %68 : vector<1x1x128xf32> to vector<8x8x128xf32>
    %70 = arith.mulf %65, %69 : vector<8x8x128xf32>
    %71 = arith.addf %64, %70 : vector<8x8x128xf32>
    %c6_88 = arith.constant 6 : index
    %c5_89 = arith.constant 5 : index
    %c0_90 = arith.constant 0 : index
    %72 = vector.load %arg6[%c6_88, %c5_89, %c0_90] : memref<14x24x128xf32, #tpu.memory_space<vmem>>, vector<8x8x128xf32>
    %c6_91 = arith.constant 6 : index
    %c0_92 = arith.constant 0 : index
    %c0_93 = arith.constant 0 : index
    %73 = vector.load %arg3[%c6_91, %c0_92, %c0_93] : memref<7x7x128xf32, #tpu.memory_space<vmem>>, vector<1x1x128xf32>
    %74 = vector.shape_cast %73 : vector<1x1x128xf32> to vector<128xf32>
    %75 = vector.shape_cast %74 : vector<128xf32> to vector<1x1x128xf32>
    %76 = vector.broadcast %75 : vector<1x1x128xf32> to vector<8x8x128xf32>
    %77 = arith.mulf %72, %76 : vector<8x8x128xf32>
    %78 = arith.addf %71, %77 : vector<8x8x128xf32>
    %c0_94 = arith.constant 0 : index
    %c6_95 = arith.constant 6 : index
    %c0_96 = arith.constant 0 : index
    %79 = vector.load %arg6[%c0_94, %c6_95, %c0_96] : memref<14x24x128xf32, #tpu.memory_space<vmem>>, vector<8x8x128xf32>
    %c0_97 = arith.constant 0 : index
    %c1_98 = arith.constant 1 : index
    %c0_99 = arith.constant 0 : index
    %80 = vector.load %arg3[%c0_97, %c1_98, %c0_99] : memref<7x7x128xf32, #tpu.memory_space<vmem>>, vector<1x1x128xf32>
    %81 = vector.shape_cast %80 : vector<1x1x128xf32> to vector<128xf32>
    %82 = vector.shape_cast %81 : vector<128xf32> to vector<1x1x128xf32>
    %83 = vector.broadcast %82 : vector<1x1x128xf32> to vector<8x8x128xf32>
    %84 = arith.mulf %79, %83 : vector<8x8x128xf32>
    %85 = arith.addf %78, %84 : vector<8x8x128xf32>
    %c1_100 = arith.constant 1 : index
    %c6_101 = arith.constant 6 : index
    %c0_102 = arith.constant 0 : index
    %86 = vector.load %arg6[%c1_100, %c6_101, %c0_102] : memref<14x24x128xf32, #tpu.memory_space<vmem>>, vector<8x8x128xf32>
    %c1_103 = arith.constant 1 : index
    %c1_104 = arith.constant 1 : index
    %c0_105 = arith.constant 0 : index
    %87 = vector.load %arg3[%c1_103, %c1_104, %c0_105] : memref<7x7x128xf32, #tpu.memory_space<vmem>>, vector<1x1x128xf32>
    %88 = vector.shape_cast %87 : vector<1x1x128xf32> to vector<128xf32>
    %89 = vector.shape_cast %88 : vector<128xf32> to vector<1x1x128xf32>
    %90 = vector.broadcast %89 : vector<1x1x128xf32> to vector<8x8x128xf32>
    %91 = arith.mulf %86, %90 : vector<8x8x128xf32>
    %92 = arith.addf %85, %91 : vector<8x8x128xf32>
    %c2_106 = arith.constant 2 : index
    %c6_107 = arith.constant 6 : index
    %c0_108 = arith.constant 0 : index
    %93 = vector.load %arg6[%c2_106, %c6_107, %c0_108] : memref<14x24x128xf32, #tpu.memory_space<vmem>>, vector<8x8x128xf32>
    %c2_109 = arith.constant 2 : index
    %c1_110 = arith.constant 1 : index
    %c0_111 = arith.constant 0 : index
    %94 = vector.load %arg3[%c2_109, %c1_110, %c0_111] : memref<7x7x128xf32, #tpu.memory_space<vmem>>, vector<1x1x128xf32>
    %95 = vector.shape_cast %94 : vector<1x1x128xf32> to vector<128xf32>
    %96 = vector.shape_cast %95 : vector<128xf32> to vector<1x1x128xf32>
    %97 = vector.broadcast %96 : vector<1x1x128xf32> to vector<8x8x128xf32>
    %98 = arith.mulf %93, %97 : vector<8x8x128xf32>
    %99 = arith.addf %92, %98 : vector<8x8x128xf32>
    %c3_112 = arith.constant 3 : index
    %c6_113 = arith.constant 6 : index
    %c0_114 = arith.constant 0 : index
    %100 = vector.load %arg6[%c3_112, %c6_113, %c0_114] : memref<14x24x128xf32, #tpu.memory_space<vmem>>, vector<8x8x128xf32>
    %c3_115 = arith.constant 3 : index
    %c1_116 = arith.constant 1 : index
    %c0_117 = arith.constant 0 : index
    %101 = vector.load %arg3[%c3_115, %c1_116, %c0_117] : memref<7x7x128xf32, #tpu.memory_space<vmem>>, vector<1x1x128xf32>
    %102 = vector.shape_cast %101 : vector<1x1x128xf32> to vector<128xf32>
    %103 = vector.shape_cast %102 : vector<128xf32> to vector<1x1x128xf32>
    %104 = vector.broadcast %103 : vector<1x1x128xf32> to vector<8x8x128xf32>
    %105 = arith.mulf %100, %104 : vector<8x8x128xf32>
    %106 = arith.addf %99, %105 : vector<8x8x128xf32>
    %c4_118 = arith.constant 4 : index
    %c6_119 = arith.constant 6 : index
    %c0_120 = arith.constant 0 : index
    %107 = vector.load %arg6[%c4_118, %c6_119, %c0_120] : memref<14x24x128xf32, #tpu.memory_space<vmem>>, vector<8x8x128xf32>
    %c4_121 = arith.constant 4 : index
    %c1_122 = arith.constant 1 : index
    %c0_123 = arith.constant 0 : index
    %108 = vector.load %arg3[%c4_121, %c1_122, %c0_123] : memref<7x7x128xf32, #tpu.memory_space<vmem>>, vector<1x1x128xf32>
    %109 = vector.shape_cast %108 : vector<1x1x128xf32> to vector<128xf32>
    %110 = vector.shape_cast %109 : vector<128xf32> to vector<1x1x128xf32>
    %111 = vector.broadcast %110 : vector<1x1x128xf32> to vector<8x8x128xf32>
    %112 = arith.mulf %107, %111 : vector<8x8x128xf32>
    %113 = arith.addf %106, %112 : vector<8x8x128xf32>
    %c5_124 = arith.constant 5 : index
    %c6_125 = arith.constant 6 : index
    %c0_126 = arith.constant 0 : index
    %114 = vector.load %arg6[%c5_124, %c6_125, %c0_126] : memref<14x24x128xf32, #tpu.memory_space<vmem>>, vector<8x8x128xf32>
    %c5_127 = arith.constant 5 : index
    %c1_128 = arith.constant 1 : index
    %c0_129 = arith.constant 0 : index
    %115 = vector.load %arg3[%c5_127, %c1_128, %c0_129] : memref<7x7x128xf32, #tpu.memory_space<vmem>>, vector<1x1x128xf32>
    %116 = vector.shape_cast %115 : vector<1x1x128xf32> to vector<128xf32>
    %117 = vector.shape_cast %116 : vector<128xf32> to vector<1x1x128xf32>
    %118 = vector.broadcast %117 : vector<1x1x128xf32> to vector<8x8x128xf32>
    %119 = arith.mulf %114, %118 : vector<8x8x128xf32>
    %120 = arith.addf %113, %119 : vector<8x8x128xf32>
    %c6_130 = arith.constant 6 : index
    %c6_131 = arith.constant 6 : index
    %c0_132 = arith.constant 0 : index
    %121 = vector.load %arg6[%c6_130, %c6_131, %c0_132] : memref<14x24x128xf32, #tpu.memory_space<vmem>>, vector<8x8x128xf32>
    %c6_133 = arith.constant 6 : index
    %c1_134 = arith.constant 1 : index
    %c0_135 = arith.constant 0 : index
    %122 = vector.load %arg3[%c6_133, %c1_134, %c0_135] : memref<7x7x128xf32, #tpu.memory_space<vmem>>, vector<1x1x128xf32>
    %123 = vector.shape_cast %122 : vector<1x1x128xf32> to vector<128xf32>
    %124 = vector.shape_cast %123 : vector<128xf32> to vector<1x1x128xf32>
    %125 = vector.broadcast %124 : vector<1x1x128xf32> to vector<8x8x128xf32>
    %126 = arith.mulf %121, %125 : vector<8x8x128xf32>
    %127 = arith.addf %120, %126 : vector<8x8x128xf32>
    %c0_136 = arith.constant 0 : index
    %c7_137 = arith.constant 7 : index
    %c0_138 = arith.constant 0 : index
    %128 = vector.load %arg6[%c0_136, %c7_137, %c0_138] : memref<14x24x128xf32, #tpu.memory_space<vmem>>, vector<8x8x128xf32>
    %c0_139 = arith.constant 0 : index
    %c2_140 = arith.constant 2 : index
    %c0_141 = arith.constant 0 : index
    %129 = vector.load %arg3[%c0_139, %c2_140, %c0_141] : memref<7x7x128xf32, #tpu.memory_space<vmem>>, vector<1x1x128xf32>
    %130 = vector.shape_cast %129 : vector<1x1x128xf32> to vector<128xf32>
    %131 = vector.shape_cast %130 : vector<128xf32> to vector<1x1x128xf32>
    %132 = vector.broadcast %131 : vector<1x1x128xf32> to vector<8x8x128xf32>
    %133 = arith.mulf %128, %132 : vector<8x8x128xf32>
    %134 = arith.addf %127, %133 : vector<8x8x128xf32>
    %c1_142 = arith.constant 1 : index
    %c7_143 = arith.constant 7 : index
    %c0_144 = arith.constant 0 : index
    %135 = vector.load %arg6[%c1_142, %c7_143, %c0_144] : memref<14x24x128xf32, #tpu.memory_space<vmem>>, vector<8x8x128xf32>
    %c1_145 = arith.constant 1 : index
    %c2_146 = arith.constant 2 : index
    %c0_147 = arith.constant 0 : index
    %136 = vector.load %arg3[%c1_145, %c2_146, %c0_147] : memref<7x7x128xf32, #tpu.memory_space<vmem>>, vector<1x1x128xf32>
    %137 = vector.shape_cast %136 : vector<1x1x128xf32> to vector<128xf32>
    %138 = vector.shape_cast %137 : vector<128xf32> to vector<1x1x128xf32>
    %139 = vector.broadcast %138 : vector<1x1x128xf32> to vector<8x8x128xf32>
    %140 = arith.mulf %135, %139 : vector<8x8x128xf32>
    %141 = arith.addf %134, %140 : vector<8x8x128xf32>
    %c2_148 = arith.constant 2 : index
    %c7_149 = arith.constant 7 : index
    %c0_150 = arith.constant 0 : index
    %142 = vector.load %arg6[%c2_148, %c7_149, %c0_150] : memref<14x24x128xf32, #tpu.memory_space<vmem>>, vector<8x8x128xf32>
    %c2_151 = arith.constant 2 : index
    %c2_152 = arith.constant 2 : index
    %c0_153 = arith.constant 0 : index
    %143 = vector.load %arg3[%c2_151, %c2_152, %c0_153] : memref<7x7x128xf32, #tpu.memory_space<vmem>>, vector<1x1x128xf32>
    %144 = vector.shape_cast %143 : vector<1x1x128xf32> to vector<128xf32>
    %145 = vector.shape_cast %144 : vector<128xf32> to vector<1x1x128xf32>
    %146 = vector.broadcast %145 : vector<1x1x128xf32> to vector<8x8x128xf32>
    %147 = arith.mulf %142, %146 : vector<8x8x128xf32>
    %148 = arith.addf %141, %147 : vector<8x8x128xf32>
    %c3_154 = arith.constant 3 : index
    %c7_155 = arith.constant 7 : index
    %c0_156 = arith.constant 0 : index
    %149 = vector.load %arg6[%c3_154, %c7_155, %c0_156] : memref<14x24x128xf32, #tpu.memory_space<vmem>>, vector<8x8x128xf32>
    %c3_157 = arith.constant 3 : index
    %c2_158 = arith.constant 2 : index
    %c0_159 = arith.constant 0 : index
    %150 = vector.load %arg3[%c3_157, %c2_158, %c0_159] : memref<7x7x128xf32, #tpu.memory_space<vmem>>, vector<1x1x128xf32>
    %151 = vector.shape_cast %150 : vector<1x1x128xf32> to vector<128xf32>
    %152 = vector.shape_cast %151 : vector<128xf32> to vector<1x1x128xf32>
    %153 = vector.broadcast %152 : vector<1x1x128xf32> to vector<8x8x128xf32>
    %154 = arith.mulf %149, %153 : vector<8x8x128xf32>
    %155 = arith.addf %148, %154 : vector<8x8x128xf32>
    %c4_160 = arith.constant 4 : index
    %c7_161 = arith.constant 7 : index
    %c0_162 = arith.constant 0 : index
    %156 = vector.load %arg6[%c4_160, %c7_161, %c0_162] : memref<14x24x128xf32, #tpu.memory_space<vmem>>, vector<8x8x128xf32>
    %c4_163 = arith.constant 4 : index
    %c2_164 = arith.constant 2 : index
    %c0_165 = arith.constant 0 : index
    %157 = vector.load %arg3[%c4_163, %c2_164, %c0_165] : memref<7x7x128xf32, #tpu.memory_space<vmem>>, vector<1x1x128xf32>
    %158 = vector.shape_cast %157 : vector<1x1x128xf32> to vector<128xf32>
    %159 = vector.shape_cast %158 : vector<128xf32> to vector<1x1x128xf32>
    %160 = vector.broadcast %159 : vector<1x1x128xf32> to vector<8x8x128xf32>
    %161 = arith.mulf %156, %160 : vector<8x8x128xf32>
    %162 = arith.addf %155, %161 : vector<8x8x128xf32>
    %c5_166 = arith.constant 5 : index
    %c7_167 = arith.constant 7 : index
    %c0_168 = arith.constant 0 : index
    %163 = vector.load %arg6[%c5_166, %c7_167, %c0_168] : memref<14x24x128xf32, #tpu.memory_space<vmem>>, vector<8x8x128xf32>
    %c5_169 = arith.constant 5 : index
    %c2_170 = arith.constant 2 : index
    %c0_171 = arith.constant 0 : index
    %164 = vector.load %arg3[%c5_169, %c2_170, %c0_171] : memref<7x7x128xf32, #tpu.memory_space<vmem>>, vector<1x1x128xf32>
    %165 = vector.shape_cast %164 : vector<1x1x128xf32> to vector<128xf32>
    %166 = vector.shape_cast %165 : vector<128xf32> to vector<1x1x128xf32>
    %167 = vector.broadcast %166 : vector<1x1x128xf32> to vector<8x8x128xf32>
    %168 = arith.mulf %163, %167 : vector<8x8x128xf32>
    %169 = arith.addf %162, %168 : vector<8x8x128xf32>
    %c6_172 = arith.constant 6 : index
    %c7_173 = arith.constant 7 : index
    %c0_174 = arith.constant 0 : index
    %170 = vector.load %arg6[%c6_172, %c7_173, %c0_174] : memref<14x24x128xf32, #tpu.memory_space<vmem>>, vector<8x8x128xf32>
    %c6_175 = arith.constant 6 : index
    %c2_176 = arith.constant 2 : index
    %c0_177 = arith.constant 0 : index
    %171 = vector.load %arg3[%c6_175, %c2_176, %c0_177] : memref<7x7x128xf32, #tpu.memory_space<vmem>>, vector<1x1x128xf32>
    %172 = vector.shape_cast %171 : vector<1x1x128xf32> to vector<128xf32>
    %173 = vector.shape_cast %172 : vector<128xf32> to vector<1x1x128xf32>
    %174 = vector.broadcast %173 : vector<1x1x128xf32> to vector<8x8x128xf32>
    %175 = arith.mulf %170, %174 : vector<8x8x128xf32>
    %176 = arith.addf %169, %175 : vector<8x8x128xf32>
    %c0_178 = arith.constant 0 : index
    %c8_179 = arith.constant 8 : index
    %c0_180 = arith.constant 0 : index
    %177 = vector.load %arg6[%c0_178, %c8_179, %c0_180] : memref<14x24x128xf32, #tpu.memory_space<vmem>>, vector<8x8x128xf32>
    %c0_181 = arith.constant 0 : index
    %c3_182 = arith.constant 3 : index
    %c0_183 = arith.constant 0 : index
    %178 = vector.load %arg3[%c0_181, %c3_182, %c0_183] : memref<7x7x128xf32, #tpu.memory_space<vmem>>, vector<1x1x128xf32>
    %179 = vector.shape_cast %178 : vector<1x1x128xf32> to vector<128xf32>
    %180 = vector.shape_cast %179 : vector<128xf32> to vector<1x1x128xf32>
    %181 = vector.broadcast %180 : vector<1x1x128xf32> to vector<8x8x128xf32>
    %182 = arith.mulf %177, %181 : vector<8x8x128xf32>
    %183 = arith.addf %176, %182 : vector<8x8x128xf32>
    %c1_184 = arith.constant 1 : index
    %c8_185 = arith.constant 8 : index
    %c0_186 = arith.constant 0 : index
    %184 = vector.load %arg6[%c1_184, %c8_185, %c0_186] : memref<14x24x128xf32, #tpu.memory_space<vmem>>, vector<8x8x128xf32>
    %c1_187 = arith.constant 1 : index
    %c3_188 = arith.constant 3 : index
    %c0_189 = arith.constant 0 : index
    %185 = vector.load %arg3[%c1_187, %c3_188, %c0_189] : memref<7x7x128xf32, #tpu.memory_space<vmem>>, vector<1x1x128xf32>
    %186 = vector.shape_cast %185 : vector<1x1x128xf32> to vector<128xf32>
    %187 = vector.shape_cast %186 : vector<128xf32> to vector<1x1x128xf32>
    %188 = vector.broadcast %187 : vector<1x1x128xf32> to vector<8x8x128xf32>
    %189 = arith.mulf %184, %188 : vector<8x8x128xf32>
    %190 = arith.addf %183, %189 : vector<8x8x128xf32>
    %c2_190 = arith.constant 2 : index
    %c8_191 = arith.constant 8 : index
    %c0_192 = arith.constant 0 : index
    %191 = vector.load %arg6[%c2_190, %c8_191, %c0_192] : memref<14x24x128xf32, #tpu.memory_space<vmem>>, vector<8x8x128xf32>
    %c2_193 = arith.constant 2 : index
    %c3_194 = arith.constant 3 : index
    %c0_195 = arith.constant 0 : index
    %192 = vector.load %arg3[%c2_193, %c3_194, %c0_195] : memref<7x7x128xf32, #tpu.memory_space<vmem>>, vector<1x1x128xf32>
    %193 = vector.shape_cast %192 : vector<1x1x128xf32> to vector<128xf32>
    %194 = vector.shape_cast %193 : vector<128xf32> to vector<1x1x128xf32>
    %195 = vector.broadcast %194 : vector<1x1x128xf32> to vector<8x8x128xf32>
    %196 = arith.mulf %191, %195 : vector<8x8x128xf32>
    %197 = arith.addf %190, %196 : vector<8x8x128xf32>
    %c3_196 = arith.constant 3 : index
    %c8_197 = arith.constant 8 : index
    %c0_198 = arith.constant 0 : index
    %198 = vector.load %arg6[%c3_196, %c8_197, %c0_198] : memref<14x24x128xf32, #tpu.memory_space<vmem>>, vector<8x8x128xf32>
    %c3_199 = arith.constant 3 : index
    %c3_200 = arith.constant 3 : index
    %c0_201 = arith.constant 0 : index
    %199 = vector.load %arg3[%c3_199, %c3_200, %c0_201] : memref<7x7x128xf32, #tpu.memory_space<vmem>>, vector<1x1x128xf32>
    %200 = vector.shape_cast %199 : vector<1x1x128xf32> to vector<128xf32>
    %201 = vector.shape_cast %200 : vector<128xf32> to vector<1x1x128xf32>
    %202 = vector.broadcast %201 : vector<1x1x128xf32> to vector<8x8x128xf32>
    %203 = arith.mulf %198, %202 : vector<8x8x128xf32>
    %204 = arith.addf %197, %203 : vector<8x8x128xf32>
    %c4_202 = arith.constant 4 : index
    %c8_203 = arith.constant 8 : index
    %c0_204 = arith.constant 0 : index
    %205 = vector.load %arg6[%c4_202, %c8_203, %c0_204] : memref<14x24x128xf32, #tpu.memory_space<vmem>>, vector<8x8x128xf32>
    %c4_205 = arith.constant 4 : index
    %c3_206 = arith.constant 3 : index
    %c0_207 = arith.constant 0 : index
    %206 = vector.load %arg3[%c4_205, %c3_206, %c0_207] : memref<7x7x128xf32, #tpu.memory_space<vmem>>, vector<1x1x128xf32>
    %207 = vector.shape_cast %206 : vector<1x1x128xf32> to vector<128xf32>
    %208 = vector.shape_cast %207 : vector<128xf32> to vector<1x1x128xf32>
    %209 = vector.broadcast %208 : vector<1x1x128xf32> to vector<8x8x128xf32>
    %210 = arith.mulf %205, %209 : vector<8x8x128xf32>
    %211 = arith.addf %204, %210 : vector<8x8x128xf32>
    %c5_208 = arith.constant 5 : index
    %c8_209 = arith.constant 8 : index
    %c0_210 = arith.constant 0 : index
    %212 = vector.load %arg6[%c5_208, %c8_209, %c0_210] : memref<14x24x128xf32, #tpu.memory_space<vmem>>, vector<8x8x128xf32>
    %c5_211 = arith.constant 5 : index
    %c3_212 = arith.constant 3 : index
    %c0_213 = arith.constant 0 : index
    %213 = vector.load %arg3[%c5_211, %c3_212, %c0_213] : memref<7x7x128xf32, #tpu.memory_space<vmem>>, vector<1x1x128xf32>
    %214 = vector.shape_cast %213 : vector<1x1x128xf32> to vector<128xf32>
    %215 = vector.shape_cast %214 : vector<128xf32> to vector<1x1x128xf32>
    %216 = vector.broadcast %215 : vector<1x1x128xf32> to vector<8x8x128xf32>
    %217 = arith.mulf %212, %216 : vector<8x8x128xf32>
    %218 = arith.addf %211, %217 : vector<8x8x128xf32>
    %c6_214 = arith.constant 6 : index
    %c8_215 = arith.constant 8 : index
    %c0_216 = arith.constant 0 : index
    %219 = vector.load %arg6[%c6_214, %c8_215, %c0_216] : memref<14x24x128xf32, #tpu.memory_space<vmem>>, vector<8x8x128xf32>
    %c6_217 = arith.constant 6 : index
    %c3_218 = arith.constant 3 : index
    %c0_219 = arith.constant 0 : index
    %220 = vector.load %arg3[%c6_217, %c3_218, %c0_219] : memref<7x7x128xf32, #tpu.memory_space<vmem>>, vector<1x1x128xf32>
    %221 = vector.shape_cast %220 : vector<1x1x128xf32> to vector<128xf32>
    %222 = vector.shape_cast %221 : vector<128xf32> to vector<1x1x128xf32>
    %223 = vector.broadcast %222 : vector<1x1x128xf32> to vector<8x8x128xf32>
    %224 = arith.mulf %219, %223 : vector<8x8x128xf32>
    %225 = arith.addf %218, %224 : vector<8x8x128xf32>
    %c0_220 = arith.constant 0 : index
    %c9_221 = arith.constant 9 : index
    %c0_222 = arith.constant 0 : index
    %226 = vector.load %arg6[%c0_220, %c9_221, %c0_222] : memref<14x24x128xf32, #tpu.memory_space<vmem>>, vector<8x8x128xf32>
    %c0_223 = arith.constant 0 : index
    %c4_224 = arith.constant 4 : index
    %c0_225 = arith.constant 0 : index
    %227 = vector.load %arg3[%c0_223, %c4_224, %c0_225] : memref<7x7x128xf32, #tpu.memory_space<vmem>>, vector<1x1x128xf32>
    %228 = vector.shape_cast %227 : vector<1x1x128xf32> to vector<128xf32>
    %229 = vector.shape_cast %228 : vector<128xf32> to vector<1x1x128xf32>
    %230 = vector.broadcast %229 : vector<1x1x128xf32> to vector<8x8x128xf32>
    %231 = arith.mulf %226, %230 : vector<8x8x128xf32>
    %232 = arith.addf %225, %231 : vector<8x8x128xf32>
    %c1_226 = arith.constant 1 : index
    %c9_227 = arith.constant 9 : index
    %c0_228 = arith.constant 0 : index
    %233 = vector.load %arg6[%c1_226, %c9_227, %c0_228] : memref<14x24x128xf32, #tpu.memory_space<vmem>>, vector<8x8x128xf32>
    %c1_229 = arith.constant 1 : index
    %c4_230 = arith.constant 4 : index
    %c0_231 = arith.constant 0 : index
    %234 = vector.load %arg3[%c1_229, %c4_230, %c0_231] : memref<7x7x128xf32, #tpu.memory_space<vmem>>, vector<1x1x128xf32>
    %235 = vector.shape_cast %234 : vector<1x1x128xf32> to vector<128xf32>
    %236 = vector.shape_cast %235 : vector<128xf32> to vector<1x1x128xf32>
    %237 = vector.broadcast %236 : vector<1x1x128xf32> to vector<8x8x128xf32>
    %238 = arith.mulf %233, %237 : vector<8x8x128xf32>
    %239 = arith.addf %232, %238 : vector<8x8x128xf32>
    %c2_232 = arith.constant 2 : index
    %c9_233 = arith.constant 9 : index
    %c0_234 = arith.constant 0 : index
    %240 = vector.load %arg6[%c2_232, %c9_233, %c0_234] : memref<14x24x128xf32, #tpu.memory_space<vmem>>, vector<8x8x128xf32>
    %c2_235 = arith.constant 2 : index
    %c4_236 = arith.constant 4 : index
    %c0_237 = arith.constant 0 : index
    %241 = vector.load %arg3[%c2_235, %c4_236, %c0_237] : memref<7x7x128xf32, #tpu.memory_space<vmem>>, vector<1x1x128xf32>
    %242 = vector.shape_cast %241 : vector<1x1x128xf32> to vector<128xf32>
    %243 = vector.shape_cast %242 : vector<128xf32> to vector<1x1x128xf32>
    %244 = vector.broadcast %243 : vector<1x1x128xf32> to vector<8x8x128xf32>
    %245 = arith.mulf %240, %244 : vector<8x8x128xf32>
    %246 = arith.addf %239, %245 : vector<8x8x128xf32>
    %c3_238 = arith.constant 3 : index
    %c9_239 = arith.constant 9 : index
    %c0_240 = arith.constant 0 : index
    %247 = vector.load %arg6[%c3_238, %c9_239, %c0_240] : memref<14x24x128xf32, #tpu.memory_space<vmem>>, vector<8x8x128xf32>
    %c3_241 = arith.constant 3 : index
    %c4_242 = arith.constant 4 : index
    %c0_243 = arith.constant 0 : index
    %248 = vector.load %arg3[%c3_241, %c4_242, %c0_243] : memref<7x7x128xf32, #tpu.memory_space<vmem>>, vector<1x1x128xf32>
    %249 = vector.shape_cast %248 : vector<1x1x128xf32> to vector<128xf32>
    %250 = vector.shape_cast %249 : vector<128xf32> to vector<1x1x128xf32>
    %251 = vector.broadcast %250 : vector<1x1x128xf32> to vector<8x8x128xf32>
    %252 = arith.mulf %247, %251 : vector<8x8x128xf32>
    %253 = arith.addf %246, %252 : vector<8x8x128xf32>
    %c4_244 = arith.constant 4 : index
    %c9_245 = arith.constant 9 : index
    %c0_246 = arith.constant 0 : index
    %254 = vector.load %arg6[%c4_244, %c9_245, %c0_246] : memref<14x24x128xf32, #tpu.memory_space<vmem>>, vector<8x8x128xf32>
    %c4_247 = arith.constant 4 : index
    %c4_248 = arith.constant 4 : index
    %c0_249 = arith.constant 0 : index
    %255 = vector.load %arg3[%c4_247, %c4_248, %c0_249] : memref<7x7x128xf32, #tpu.memory_space<vmem>>, vector<1x1x128xf32>
    %256 = vector.shape_cast %255 : vector<1x1x128xf32> to vector<128xf32>
    %257 = vector.shape_cast %256 : vector<128xf32> to vector<1x1x128xf32>
    %258 = vector.broadcast %257 : vector<1x1x128xf32> to vector<8x8x128xf32>
    %259 = arith.mulf %254, %258 : vector<8x8x128xf32>
    %260 = arith.addf %253, %259 : vector<8x8x128xf32>
    %c5_250 = arith.constant 5 : index
    %c9_251 = arith.constant 9 : index
    %c0_252 = arith.constant 0 : index
    %261 = vector.load %arg6[%c5_250, %c9_251, %c0_252] : memref<14x24x128xf32, #tpu.memory_space<vmem>>, vector<8x8x128xf32>
    %c5_253 = arith.constant 5 : index
    %c4_254 = arith.constant 4 : index
    %c0_255 = arith.constant 0 : index
    %262 = vector.load %arg3[%c5_253, %c4_254, %c0_255] : memref<7x7x128xf32, #tpu.memory_space<vmem>>, vector<1x1x128xf32>
    %263 = vector.shape_cast %262 : vector<1x1x128xf32> to vector<128xf32>
    %264 = vector.shape_cast %263 : vector<128xf32> to vector<1x1x128xf32>
    %265 = vector.broadcast %264 : vector<1x1x128xf32> to vector<8x8x128xf32>
    %266 = arith.mulf %261, %265 : vector<8x8x128xf32>
    %267 = arith.addf %260, %266 : vector<8x8x128xf32>
    %c6_256 = arith.constant 6 : index
    %c9_257 = arith.constant 9 : index
    %c0_258 = arith.constant 0 : index
    %268 = vector.load %arg6[%c6_256, %c9_257, %c0_258] : memref<14x24x128xf32, #tpu.memory_space<vmem>>, vector<8x8x128xf32>
    %c6_259 = arith.constant 6 : index
    %c4_260 = arith.constant 4 : index
    %c0_261 = arith.constant 0 : index
    %269 = vector.load %arg3[%c6_259, %c4_260, %c0_261] : memref<7x7x128xf32, #tpu.memory_space<vmem>>, vector<1x1x128xf32>
    %270 = vector.shape_cast %269 : vector<1x1x128xf32> to vector<128xf32>
    %271 = vector.shape_cast %270 : vector<128xf32> to vector<1x1x128xf32>
    %272 = vector.broadcast %271 : vector<1x1x128xf32> to vector<8x8x128xf32>
    %273 = arith.mulf %268, %272 : vector<8x8x128xf32>
    %274 = arith.addf %267, %273 : vector<8x8x128xf32>
    %c0_262 = arith.constant 0 : index
    %c10_263 = arith.constant 10 : index
    %c0_264 = arith.constant 0 : index
    %275 = vector.load %arg6[%c0_262, %c10_263, %c0_264] : memref<14x24x128xf32, #tpu.memory_space<vmem>>, vector<8x8x128xf32>
    %c0_265 = arith.constant 0 : index
    %c5_266 = arith.constant 5 : index
    %c0_267 = arith.constant 0 : index
    %276 = vector.load %arg3[%c0_265, %c5_266, %c0_267] : memref<7x7x128xf32, #tpu.memory_space<vmem>>, vector<1x1x128xf32>
    %277 = vector.shape_cast %276 : vector<1x1x128xf32> to vector<128xf32>
    %278 = vector.shape_cast %277 : vector<128xf32> to vector<1x1x128xf32>
    %279 = vector.broadcast %278 : vector<1x1x128xf32> to vector<8x8x128xf32>
    %280 = arith.mulf %275, %279 : vector<8x8x128xf32>
    %281 = arith.addf %274, %280 : vector<8x8x128xf32>
    %c1_268 = arith.constant 1 : index
    %c10_269 = arith.constant 10 : index
    %c0_270 = arith.constant 0 : index
    %282 = vector.load %arg6[%c1_268, %c10_269, %c0_270] : memref<14x24x128xf32, #tpu.memory_space<vmem>>, vector<8x8x128xf32>
    %c1_271 = arith.constant 1 : index
    %c5_272 = arith.constant 5 : index
    %c0_273 = arith.constant 0 : index
    %283 = vector.load %arg3[%c1_271, %c5_272, %c0_273] : memref<7x7x128xf32, #tpu.memory_space<vmem>>, vector<1x1x128xf32>
    %284 = vector.shape_cast %283 : vector<1x1x128xf32> to vector<128xf32>
    %285 = vector.shape_cast %284 : vector<128xf32> to vector<1x1x128xf32>
    %286 = vector.broadcast %285 : vector<1x1x128xf32> to vector<8x8x128xf32>
    %287 = arith.mulf %282, %286 : vector<8x8x128xf32>
    %288 = arith.addf %281, %287 : vector<8x8x128xf32>
    %c2_274 = arith.constant 2 : index
    %c10_275 = arith.constant 10 : index
    %c0_276 = arith.constant 0 : index
    %289 = vector.load %arg6[%c2_274, %c10_275, %c0_276] : memref<14x24x128xf32, #tpu.memory_space<vmem>>, vector<8x8x128xf32>
    %c2_277 = arith.constant 2 : index
    %c5_278 = arith.constant 5 : index
    %c0_279 = arith.constant 0 : index
    %290 = vector.load %arg3[%c2_277, %c5_278, %c0_279] : memref<7x7x128xf32, #tpu.memory_space<vmem>>, vector<1x1x128xf32>
    %291 = vector.shape_cast %290 : vector<1x1x128xf32> to vector<128xf32>
    %292 = vector.shape_cast %291 : vector<128xf32> to vector<1x1x128xf32>
    %293 = vector.broadcast %292 : vector<1x1x128xf32> to vector<8x8x128xf32>
    %294 = arith.mulf %289, %293 : vector<8x8x128xf32>
    %295 = arith.addf %288, %294 : vector<8x8x128xf32>
    %c3_280 = arith.constant 3 : index
    %c10_281 = arith.constant 10 : index
    %c0_282 = arith.constant 0 : index
    %296 = vector.load %arg6[%c3_280, %c10_281, %c0_282] : memref<14x24x128xf32, #tpu.memory_space<vmem>>, vector<8x8x128xf32>
    %c3_283 = arith.constant 3 : index
    %c5_284 = arith.constant 5 : index
    %c0_285 = arith.constant 0 : index
    %297 = vector.load %arg3[%c3_283, %c5_284, %c0_285] : memref<7x7x128xf32, #tpu.memory_space<vmem>>, vector<1x1x128xf32>
    %298 = vector.shape_cast %297 : vector<1x1x128xf32> to vector<128xf32>
    %299 = vector.shape_cast %298 : vector<128xf32> to vector<1x1x128xf32>
    %300 = vector.broadcast %299 : vector<1x1x128xf32> to vector<8x8x128xf32>
    %301 = arith.mulf %296, %300 : vector<8x8x128xf32>
    %302 = arith.addf %295, %301 : vector<8x8x128xf32>
    %c4_286 = arith.constant 4 : index
    %c10_287 = arith.constant 10 : index
    %c0_288 = arith.constant 0 : index
    %303 = vector.load %arg6[%c4_286, %c10_287, %c0_288] : memref<14x24x128xf32, #tpu.memory_space<vmem>>, vector<8x8x128xf32>
    %c4_289 = arith.constant 4 : index
    %c5_290 = arith.constant 5 : index
    %c0_291 = arith.constant 0 : index
    %304 = vector.load %arg3[%c4_289, %c5_290, %c0_291] : memref<7x7x128xf32, #tpu.memory_space<vmem>>, vector<1x1x128xf32>
    %305 = vector.shape_cast %304 : vector<1x1x128xf32> to vector<128xf32>
    %306 = vector.shape_cast %305 : vector<128xf32> to vector<1x1x128xf32>
    %307 = vector.broadcast %306 : vector<1x1x128xf32> to vector<8x8x128xf32>
    %308 = arith.mulf %303, %307 : vector<8x8x128xf32>
    %309 = arith.addf %302, %308 : vector<8x8x128xf32>
    %c5_292 = arith.constant 5 : index
    %c10_293 = arith.constant 10 : index
    %c0_294 = arith.constant 0 : index
    %310 = vector.load %arg6[%c5_292, %c10_293, %c0_294] : memref<14x24x128xf32, #tpu.memory_space<vmem>>, vector<8x8x128xf32>
    %c5_295 = arith.constant 5 : index
    %c5_296 = arith.constant 5 : index
    %c0_297 = arith.constant 0 : index
    %311 = vector.load %arg3[%c5_295, %c5_296, %c0_297] : memref<7x7x128xf32, #tpu.memory_space<vmem>>, vector<1x1x128xf32>
    %312 = vector.shape_cast %311 : vector<1x1x128xf32> to vector<128xf32>
    %313 = vector.shape_cast %312 : vector<128xf32> to vector<1x1x128xf32>
    %314 = vector.broadcast %313 : vector<1x1x128xf32> to vector<8x8x128xf32>
    %315 = arith.mulf %310, %314 : vector<8x8x128xf32>
    %316 = arith.addf %309, %315 : vector<8x8x128xf32>
    %c6_298 = arith.constant 6 : index
    %c10_299 = arith.constant 10 : index
    %c0_300 = arith.constant 0 : index
    %317 = vector.load %arg6[%c6_298, %c10_299, %c0_300] : memref<14x24x128xf32, #tpu.memory_space<vmem>>, vector<8x8x128xf32>
    %c6_301 = arith.constant 6 : index
    %c5_302 = arith.constant 5 : index
    %c0_303 = arith.constant 0 : index
    %318 = vector.load %arg3[%c6_301, %c5_302, %c0_303] : memref<7x7x128xf32, #tpu.memory_space<vmem>>, vector<1x1x128xf32>
    %319 = vector.shape_cast %318 : vector<1x1x128xf32> to vector<128xf32>
    %320 = vector.shape_cast %319 : vector<128xf32> to vector<1x1x128xf32>
    %321 = vector.broadcast %320 : vector<1x1x128xf32> to vector<8x8x128xf32>
    %322 = arith.mulf %317, %321 : vector<8x8x128xf32>
    %323 = arith.addf %316, %322 : vector<8x8x128xf32>
    %c0_304 = arith.constant 0 : index
    %c11_305 = arith.constant 11 : index
    %c0_306 = arith.constant 0 : index
    %324 = vector.load %arg6[%c0_304, %c11_305, %c0_306] : memref<14x24x128xf32, #tpu.memory_space<vmem>>, vector<8x8x128xf32>
    %c0_307 = arith.constant 0 : index
    %c6_308 = arith.constant 6 : index
    %c0_309 = arith.constant 0 : index
    %325 = vector.load %arg3[%c0_307, %c6_308, %c0_309] : memref<7x7x128xf32, #tpu.memory_space<vmem>>, vector<1x1x128xf32>
    %326 = vector.shape_cast %325 : vector<1x1x128xf32> to vector<128xf32>
    %327 = vector.shape_cast %326 : vector<128xf32> to vector<1x1x128xf32>
    %328 = vector.broadcast %327 : vector<1x1x128xf32> to vector<8x8x128xf32>
    %329 = arith.mulf %324, %328 : vector<8x8x128xf32>
    %330 = arith.addf %323, %329 : vector<8x8x128xf32>
    %c1_310 = arith.constant 1 : index
    %c11_311 = arith.constant 11 : index
    %c0_312 = arith.constant 0 : index
    %331 = vector.load %arg6[%c1_310, %c11_311, %c0_312] : memref<14x24x128xf32, #tpu.memory_space<vmem>>, vector<8x8x128xf32>
    %c1_313 = arith.constant 1 : index
    %c6_314 = arith.constant 6 : index
    %c0_315 = arith.constant 0 : index
    %332 = vector.load %arg3[%c1_313, %c6_314, %c0_315] : memref<7x7x128xf32, #tpu.memory_space<vmem>>, vector<1x1x128xf32>
    %333 = vector.shape_cast %332 : vector<1x1x128xf32> to vector<128xf32>
    %334 = vector.shape_cast %333 : vector<128xf32> to vector<1x1x128xf32>
    %335 = vector.broadcast %334 : vector<1x1x128xf32> to vector<8x8x128xf32>
    %336 = arith.mulf %331, %335 : vector<8x8x128xf32>
    %337 = arith.addf %330, %336 : vector<8x8x128xf32>
    %c2_316 = arith.constant 2 : index
    %c11_317 = arith.constant 11 : index
    %c0_318 = arith.constant 0 : index
    %338 = vector.load %arg6[%c2_316, %c11_317, %c0_318] : memref<14x24x128xf32, #tpu.memory_space<vmem>>, vector<8x8x128xf32>
    %c2_319 = arith.constant 2 : index
    %c6_320 = arith.constant 6 : index
    %c0_321 = arith.constant 0 : index
    %339 = vector.load %arg3[%c2_319, %c6_320, %c0_321] : memref<7x7x128xf32, #tpu.memory_space<vmem>>, vector<1x1x128xf32>
    %340 = vector.shape_cast %339 : vector<1x1x128xf32> to vector<128xf32>
    %341 = vector.shape_cast %340 : vector<128xf32> to vector<1x1x128xf32>
    %342 = vector.broadcast %341 : vector<1x1x128xf32> to vector<8x8x128xf32>
    %343 = arith.mulf %338, %342 : vector<8x8x128xf32>
    %344 = arith.addf %337, %343 : vector<8x8x128xf32>
    %c3_322 = arith.constant 3 : index
    %c11_323 = arith.constant 11 : index
    %c0_324 = arith.constant 0 : index
    %345 = vector.load %arg6[%c3_322, %c11_323, %c0_324] : memref<14x24x128xf32, #tpu.memory_space<vmem>>, vector<8x8x128xf32>
    %c3_325 = arith.constant 3 : index
    %c6_326 = arith.constant 6 : index
    %c0_327 = arith.constant 0 : index
    %346 = vector.load %arg3[%c3_325, %c6_326, %c0_327] : memref<7x7x128xf32, #tpu.memory_space<vmem>>, vector<1x1x128xf32>
    %347 = vector.shape_cast %346 : vector<1x1x128xf32> to vector<128xf32>
    %348 = vector.shape_cast %347 : vector<128xf32> to vector<1x1x128xf32>
    %349 = vector.broadcast %348 : vector<1x1x128xf32> to vector<8x8x128xf32>
    %350 = arith.mulf %345, %349 : vector<8x8x128xf32>
    %351 = arith.addf %344, %350 : vector<8x8x128xf32>
    %c4_328 = arith.constant 4 : index
    %c11_329 = arith.constant 11 : index
    %c0_330 = arith.constant 0 : index
    %352 = vector.load %arg6[%c4_328, %c11_329, %c0_330] : memref<14x24x128xf32, #tpu.memory_space<vmem>>, vector<8x8x128xf32>
    %c4_331 = arith.constant 4 : index
    %c6_332 = arith.constant 6 : index
    %c0_333 = arith.constant 0 : index
    %353 = vector.load %arg3[%c4_331, %c6_332, %c0_333] : memref<7x7x128xf32, #tpu.memory_space<vmem>>, vector<1x1x128xf32>
    %354 = vector.shape_cast %353 : vector<1x1x128xf32> to vector<128xf32>
    %355 = vector.shape_cast %354 : vector<128xf32> to vector<1x1x128xf32>
    %356 = vector.broadcast %355 : vector<1x1x128xf32> to vector<8x8x128xf32>
    %357 = arith.mulf %352, %356 : vector<8x8x128xf32>
    %358 = arith.addf %351, %357 : vector<8x8x128xf32>
    %c5_334 = arith.constant 5 : index
    %c11_335 = arith.constant 11 : index
    %c0_336 = arith.constant 0 : index
    %359 = vector.load %arg6[%c5_334, %c11_335, %c0_336] : memref<14x24x128xf32, #tpu.memory_space<vmem>>, vector<8x8x128xf32>
    %c5_337 = arith.constant 5 : index
    %c6_338 = arith.constant 6 : index
    %c0_339 = arith.constant 0 : index
    %360 = vector.load %arg3[%c5_337, %c6_338, %c0_339] : memref<7x7x128xf32, #tpu.memory_space<vmem>>, vector<1x1x128xf32>
    %361 = vector.shape_cast %360 : vector<1x1x128xf32> to vector<128xf32>
    %362 = vector.shape_cast %361 : vector<128xf32> to vector<1x1x128xf32>
    %363 = vector.broadcast %362 : vector<1x1x128xf32> to vector<8x8x128xf32>
    %364 = arith.mulf %359, %363 : vector<8x8x128xf32>
    %365 = arith.addf %358, %364 : vector<8x8x128xf32>
    %c6_340 = arith.constant 6 : index
    %c11_341 = arith.constant 11 : index
    %c0_342 = arith.constant 0 : index
    %366 = vector.load %arg6[%c6_340, %c11_341, %c0_342] : memref<14x24x128xf32, #tpu.memory_space<vmem>>, vector<8x8x128xf32>
    %c6_343 = arith.constant 6 : index
    %c6_344 = arith.constant 6 : index
    %c0_345 = arith.constant 0 : index
    %367 = vector.load %arg3[%c6_343, %c6_344, %c0_345] : memref<7x7x128xf32, #tpu.memory_space<vmem>>, vector<1x1x128xf32>
    %368 = vector.shape_cast %367 : vector<1x1x128xf32> to vector<128xf32>
    %369 = vector.shape_cast %368 : vector<128xf32> to vector<1x1x128xf32>
    %370 = vector.broadcast %369 : vector<1x1x128xf32> to vector<8x8x128xf32>
    %371 = arith.mulf %366, %370 : vector<8x8x128xf32>
    %372 = arith.addf %365, %371 : vector<8x8x128xf32>
    %373 = vector.extract_strided_slice %372 {offsets = [0, 0, 0], sizes = [1, 8, 128], strides = [1, 1, 1]} : vector<8x8x128xf32> to vector<1x8x128xf32>
    %c0_346 = arith.constant 0 : index
    %c2_347 = arith.constant 2 : index
    %c0_348 = arith.constant 0 : index
    %374 = vector.load %arg5[%c0_346, %c2_347, %c0_348] : memref<1x66x128xf32, #tpu.memory_space<vmem>>, vector<1x8x128xf32>
    tpu.vector_store %arg5[%c0_346, %c2_347, %c0_348], %373 {strides = array<i32>} : memref<1x66x128xf32, #tpu.memory_space<vmem>>, vector<1x8x128xf32>,
    %375 = vector.extract_strided_slice %372 {offsets = [1, 0, 0], sizes = [1, 8, 128], strides = [1, 1, 1]} : vector<8x8x128xf32> to vector<1x8x128xf32>
    %c0_349 = arith.constant 0 : index
    %c10_350 = arith.constant 10 : index
    %c0_351 = arith.constant 0 : index
    %376 = vector.load %arg5[%c0_349, %c10_350, %c0_351] : memref<1x66x128xf32, #tpu.memory_space<vmem>>, vector<1x8x128xf32>
    tpu.vector_store %arg5[%c0_349, %c10_350, %c0_351], %375 {strides = array<i32>} : memref<1x66x128xf32, #tpu.memory_space<vmem>>, vector<1x8x128xf32>,
    %377 = vector.extract_strided_slice %372 {offsets = [2, 0, 0], sizes = [1, 8, 128], strides = [1, 1, 1]} : vector<8x8x128xf32> to vector<1x8x128xf32>
    %c0_352 = arith.constant 0 : index
    %c18_353 = arith.constant 18 : index
    %c0_354 = arith.constant 0 : index
    %378 = vector.load %arg5[%c0_352, %c18_353, %c0_354] : memref<1x66x128xf32, #tpu.memory_space<vmem>>, vector<1x8x128xf32>
    tpu.vector_store %arg5[%c0_352, %c18_353, %c0_354], %377 {strides = array<i32>} : memref<1x66x128xf32, #tpu.memory_space<vmem>>, vector<1x8x128xf32>,
    %379 = vector.extract_strided_slice %372 {offsets = [3, 0, 0], sizes = [1, 8, 128], strides = [1, 1, 1]} : vector<8x8x128xf32> to vector<1x8x128xf32>
    %c0_355 = arith.constant 0 : index
    %c26_356 = arith.constant 26 : index
    %c0_357 = arith.constant 0 : index
    %380 = vector.load %arg5[%c0_355, %c26_356, %c0_357] : memref<1x66x128xf32, #tpu.memory_space<vmem>>, vector<1x8x128xf32>
    tpu.vector_store %arg5[%c0_355, %c26_356, %c0_357], %379 {strides = array<i32>} : memref<1x66x128xf32, #tpu.memory_space<vmem>>, vector<1x8x128xf32>,
    %381 = vector.extract_strided_slice %372 {offsets = [4, 0, 0], sizes = [1, 8, 128], strides = [1, 1, 1]} : vector<8x8x128xf32> to vector<1x8x128xf32>
    %c0_358 = arith.constant 0 : index
    %c34_359 = arith.constant 34 : index
    %c0_360 = arith.constant 0 : index
    %382 = vector.load %arg5[%c0_358, %c34_359, %c0_360] : memref<1x66x128xf32, #tpu.memory_space<vmem>>, vector<1x8x128xf32>
    tpu.vector_store %arg5[%c0_358, %c34_359, %c0_360], %381 {strides = array<i32>} : memref<1x66x128xf32, #tpu.memory_space<vmem>>, vector<1x8x128xf32>,
    %383 = vector.extract_strided_slice %372 {offsets = [5, 0, 0], sizes = [1, 8, 128], strides = [1, 1, 1]} : vector<8x8x128xf32> to vector<1x8x128xf32>
    %c0_361 = arith.constant 0 : index
    %c42_362 = arith.constant 42 : index
    %c0_363 = arith.constant 0 : index
    %384 = vector.load %arg5[%c0_361, %c42_362, %c0_363] : memref<1x66x128xf32, #tpu.memory_space<vmem>>, vector<1x8x128xf32>
    tpu.vector_store %arg5[%c0_361, %c42_362, %c0_363], %383 {strides = array<i32>} : memref<1x66x128xf32, #tpu.memory_space<vmem>>, vector<1x8x128xf32>,
    %385 = vector.extract_strided_slice %372 {offsets = [6, 0, 0], sizes = [1, 8, 128], strides = [1, 1, 1]} : vector<8x8x128xf32> to vector<1x8x128xf32>
    %c0_364 = arith.constant 0 : index
    %c50_365 = arith.constant 50 : index
    %c0_366 = arith.constant 0 : index
    %386 = vector.load %arg5[%c0_364, %c50_365, %c0_366] : memref<1x66x128xf32, #tpu.memory_space<vmem>>, vector<1x8x128xf32>
    tpu.vector_store %arg5[%c0_364, %c50_365, %c0_366], %385 {strides = array<i32>} : memref<1x66x128xf32, #tpu.memory_space<vmem>>, vector<1x8x128xf32>,
    %387 = vector.extract_strided_slice %372 {offsets = [7, 0, 0], sizes = [1, 8, 128], strides = [1, 1, 1]} : vector<8x8x128xf32> to vector<1x8x128xf32>
    %c0_367 = arith.constant 0 : index
    %c58_368 = arith.constant 58 : index
    %c0_369 = arith.constant 0 : index
    %388 = vector.load %arg5[%c0_367, %c58_368, %c0_369] : memref<1x66x128xf32, #tpu.memory_space<vmem>>, vector<1x8x128xf32>
    tpu.vector_store %arg5[%c0_367, %c58_368, %c0_369], %387 {strides = array<i32>} : memref<1x66x128xf32, #tpu.memory_space<vmem>>, vector<1x8x128xf32>,
    return
  }
  func.func @transform_0(%arg0: i32, %arg1: i32) -> (i32, i32, i32) {
    %c0_i32 = arith.constant 0 : i32
    %c0_i32_0 = arith.constant 0 : i32
    return %arg0, %c0_i32, %arg1 : i32, i32, i32
  }
  func.func @transform_1(%arg0: i32, %arg1: i32) -> (i32, i32, i32) {
    %c0_i32 = arith.constant 0 : i32
    %c0_i32_0 = arith.constant 0 : i32
    %c0_i32_1 = arith.constant 0 : i32
    return %c0_i32, %c0_i32_0, %arg1 : i32, i32, i32
  }
  func.func @transform_2(%arg0: i32, %arg1: i32) -> (i32, i32) {
    %c0_i32 = arith.constant 0 : i32
    %c0_i32_0 = arith.constant 0 : i32
    return %c0_i32, %arg1 : i32, i32
  }
  func.func @transform_3(%arg0: i32, %arg1: i32) -> (i32, i32, i32) {
    %c0_i32 = arith.constant 0 : i32
    %c0_i32_0 = arith.constant 0 : i32
    return %arg0, %c0_i32, %arg1 : i32, i32, i32
  }
}

</mosaic_0001>

<llo_original>
// kernel: tpu_custom_call.1
$region0: #{tpu_custom_call.1}
  #allocation0 [shape = 'u32[]', space=smem, size = 0x4, offset = 0x4, fixed_abs, tag = 'smem constant byte address 0x4 - core index']
  #allocation1 [shape = 'u32[144,128]{1,0:T(1,128)}', space=vmem, size = 0x12000, scoped, tag = 'internal scratch']
  #allocation2 [shape = 'f32[14,24,128]{2,1,0:T(8,128)}', space=vmem, size = 0x2a000, scoped, tag = 'scratch operand']
  %s0 = inlined_call_operand.vmem [shape: f32[2,66,128], index: 0, kind: input, shape index: {}]
  %s1 = inlined_call_operand.vmem [shape: f32[7,7,128], index: 1, kind: input, shape index: {}]
  %s2 = inlined_call_operand.vmem [shape: f32[1,128], index: 2, kind: input, shape index: {}]
  %s3 = inlined_call_operand.vmem [shape: f32[2,66,128], index: 3, kind: output, shape index: {}]
  %s4 = sld [smem:[#allocation0]]
  $region45: #{tpu_custom_call.1} parent=0
    _
  %s6 = ssub.s32 1, %s4
  %s7 = scalar_select 0, %s6, %s4
  loop: start=0, step=1, limit=4
  $region2: #{tpu_custom_call.1} parent=0 // loop_pre_header
    _
  $region3: #{tpu_custom_call.1} parent=0 // loop_header
    %s9 = sphi 0, %s13
    %p10 = scmp.ge.s32.totalorder %s9, 4
    %s16 = sphi 0, %s28
    %s17 = sphi 0, %s24
    %s18 = sphi 0, %s16
    %s19 = sphi 0, %s17
    %s20 = sphi 0, %s18
    %s21 = sphi 0, %s19
    %s33 = sphi 0, %s35
    %s36 = sphi 0, %s33
    %s37 = sphi 0, %s36
    %s53 = sphi 0, %s37
    %s59 = sphi 0, %s61
    %s62 = sphi 0, %s59
    %s63 = sphi 0, %s62
    %s79 = sphi 0, %s63
    %s85 = sphi 0, %s87
    %s88 = sphi 0, %s85
    %s89 = sphi 0, %s88
    %s105 = sphi 0, %s89
    %s113 = sphi 0, %s115
    %s116 = sphi 0, %s113
    %s117 = sphi 0, %s116
    %s133 = sphi 0, %s117
  $region4: #{tpu_custom_call.1} parent=0 // loop_header_branch
    %12 = sbr.rel (%p10) target = $region8
  $region5: #{tpu_custom_call.1} parent=0 // loop_body
    %s14 = ssub.s32 %s9, 1
    %s15 = ssub.s32 %s9, 2
    %s22 = sadd.s32 1, %s17
    %p23 = scmp.ge.s32.totalorder %s22, 1
    %s24 = scalar_select %p23, 0, %s22
    %s25 = sadd.s32 1, %s16
    %s26 = scalar_select %p23, %s25, %s16
    %p27 = scmp.ge.s32.totalorder %s26, 2
    %s28 = scalar_select %p27, 0, %s26
    %s29 = ssub.s32 %s16, %s28
    %s30 = ssub.s32 %s17, %s24
    %s31 = sor.u32 %s29, %s30
    %p32 = scmp.eq.s32.totalorder %s31, 0
    %s34 = sadd.s32 %s33, 1
    %s35 = scalar_select %p32, %s33, %s34
    %p38 = pneg %p32
    %p39 = scmp.eq.s32.totalorder %s9, 1
    %p40 = por %p38, %p39
    %p41 = scmp.ne.s32.totalorder %s33, %s36
    %p42 = scmp.eq.s32.totalorder %s9, 0
    %p43 = por %p41, %p42
    %p44 = scmp.ne.s32.totalorder %s33, %s36
    %p45 = scmp.eq.s32.totalorder %s14, 1
    %p46 = por %p44, %p45
    %p47 = scmp.ne.s32.totalorder %s36, %s37
    %p48 = scmp.eq.s32.totalorder %s14, 0
    %p49 = por %p47, %p48
    %p50 = scmp.ne.s32.totalorder %s36, %s37
    %p51 = scmp.eq.s32.totalorder %s15, 1
    %p52 = por %p50, %p51
    %p54 = scmp.ne.s32.totalorder %s37, %s53
    %p55 = scmp.eq.s32.totalorder %s15, 0
    %p56 = por %p54, %p55
    %s57 = ssub.s32 %s17, %s24
    %p58 = scmp.eq.s32.totalorder %s57, 0
    %s60 = sadd.s32 %s59, 1
    %s61 = scalar_select %p58, %s59, %s60
    %p64 = pneg %p58
    %p65 = scmp.eq.s32.totalorder %s9, 1
    %p66 = por %p64, %p65
    %p67 = scmp.ne.s32.totalorder %s59, %s62
    %p68 = scmp.eq.s32.totalorder %s9, 0
    %p69 = por %p67, %p68
    %p70 = scmp.ne.s32.totalorder %s59, %s62
    %p71 = scmp.eq.s32.totalorder %s14, 1
    %p72 = por %p70, %p71
    %p73 = scmp.ne.s32.totalorder %s62, %s63
    %p74 = scmp.eq.s32.totalorder %s14, 0
    %p75 = por %p73, %p74
    %p76 = scmp.ne.s32.totalorder %s62, %s63
    %p77 = scmp.eq.s32.totalorder %s15, 1
    %p78 = por %p76, %p77
    %p80 = scmp.ne.s32.totalorder %s63, %s79
    %p81 = scmp.eq.s32.totalorder %s15, 0
    %p82 = por %p80, %p81
    %s83 = ssub.s32 %s17, %s24
    %p84 = scmp.eq.s32.totalorder %s83, 0
    %s86 = sadd.s32 %s85, 1
    %s87 = scalar_select %p84, %s85, %s86
    %p90 = pneg %p84
    %p91 = scmp.eq.s32.totalorder %s9, 1
    %p92 = por %p90, %p91
    %p93 = scmp.ne.s32.totalorder %s85, %s88
    %p94 = scmp.eq.s32.totalorder %s9, 0
    %p95 = por %p93, %p94
    %p96 = scmp.ne.s32.totalorder %s85, %s88
    %p97 = scmp.eq.s32.totalorder %s14, 1
    %p98 = por %p96, %p97
    %p99 = scmp.ne.s32.totalorder %s88, %s89
    %p100 = scmp.eq.s32.totalorder %s14, 0
    %p101 = por %p99, %p100
    %p102 = scmp.ne.s32.totalorder %s88, %s89
    %p103 = scmp.eq.s32.totalorder %s15, 1
    %p104 = por %p102, %p103
    %p106 = scmp.ne.s32.totalorder %s89, %s105
    %p107 = scmp.eq.s32.totalorder %s15, 0
    %p108 = por %p106, %p107
    %s109 = ssub.s32 %s16, %s28
    %s110 = ssub.s32 %s17, %s24
    %s111 = sor.u32 %s109, %s110
    %p112 = scmp.eq.s32.totalorder %s111, 0
    %s114 = sadd.s32 %s113, 1
    %s115 = scalar_select %p112, %s113, %s114
    %p118 = pneg %p112
    %p119 = scmp.eq.s32.totalorder %s9, 1
    %p120 = por %p118, %p119
    %p121 = scmp.ne.s32.totalorder %s113, %s116
    %p122 = scmp.eq.s32.totalorder %s9, 0
    %p123 = por %p121, %p122
    %p124 = scmp.ne.s32.totalorder %s113, %s116
    %p125 = scmp.eq.s32.totalorder %s14, 1
    %p126 = por %p124, %p125
    %p127 = scmp.ne.s32.totalorder %s116, %s117
    %p128 = scmp.eq.s32.totalorder %s14, 0
    %p129 = por %p127, %p128
    %p130 = scmp.ne.s32.totalorder %s116, %s117
    %p131 = scmp.eq.s32.totalorder %s15, 1
    %p132 = por %p130, %p131
    %p134 = scmp.ne.s32.totalorder %s117, %s133
    %p135 = scmp.eq.s32.totalorder %s15, 0
    %p136 = por %p134, %p135
    %p137 = scmp.le.s32.totalorder 1, %s9
    %p138 = scmp.lt.s32.totalorder %s9, 3
    %p139 = pnand %p137, %p138
    %p140 = pneg %p139
    // Predicated region
    $region9: #{tpu_custom_call.1} parent=5 // pred_check
      _
    $region10: #{tpu_custom_call.1} parent=5 // pred_check_branch
      %142 = sbr.rel (%p139) target = $region12
    $region11: #{tpu_custom_call.1} parent=5 // pred_region
      %s143 = ssub.s32 %s9, 1
      // Predicated region
      $region13: #{tpu_custom_call.1} parent=11 // pred_check
        %p144 = pneg %p75
      $region14: #{tpu_custom_call.1} parent=11 // pred_check_branch
        %146 = sbr.rel (%p144) target = $region16
      $region15: #{tpu_custom_call.1} parent=11 // pred_region
        %p147 = scmp.lt.s32.totalorder %s19, 0
        %s148 = scalar_select %p147, %s19, 0
        %s149 = smul.addr %s148, 8
        %s150 = scalar_lea.vmem %s1, %s149
      $region16: #{tpu_custom_call.1} parent=11 // pred_fallthru
        _
      // Predicated region
      $region17: #{tpu_custom_call.1} parent=11 // pred_check
        %p151 = pneg %p101
      $region18: #{tpu_custom_call.1} parent=11 // pred_check_branch
        %153 = sbr.rel (%p151) target = $region20
      $region19: #{tpu_custom_call.1} parent=11 // pred_region
        %p154 = scmp.lt.s32.totalorder %s19, 0
        %s155 = scalar_select %p154, %s19, 0
        %s156 = scalar_lea.vmem %s2, %s155
      $region20: #{tpu_custom_call.1} parent=11 // pred_fallthru
        _
    $region12: #{tpu_custom_call.1} parent=5 // pred_fallthru
      _
    %p157 = scmp.lt.s32.totalorder %s9, 2
    // Predicated region
    $region21: #{tpu_custom_call.1} parent=5 // pred_check
      %p158 = pneg %p157
    $region22: #{tpu_custom_call.1} parent=5 // pred_check_branch
      %160 = sbr.rel (%p158) target = $region24
    $region23: #{tpu_custom_call.1} parent=5 // pred_region
      // Predicated region
      $region25: #{tpu_custom_call.1} parent=23 // pred_check
        %p161 = pneg %p43
      $region26: #{tpu_custom_call.1} parent=23 // pred_check_branch
        %163 = sbr.rel (%p161) target = $region28
      $region27: #{tpu_custom_call.1} parent=23 // pred_region
        %p164 = scmp.lt.s32.totalorder %s16, 1
        %s165 = scalar_select %p164, %s16, 1
        %p166 = scmp.lt.s32.totalorder %s17, 0
        %s167 = scalar_select %p166, %s17, 0
        %s168 = smul.addr %s165, 9
        %s169 = sadd.s32 %s167, %s168
        %s170 = smul.addr %s169, 8
        %s171 = scalar_lea.vmem %s0, %s170
      $region28: #{tpu_custom_call.1} parent=23 // pred_fallthru
        _
    $region24: #{tpu_custom_call.1} parent=5 // pred_fallthru
      _
    %p172 = scmp.le.s32.totalorder 1, %s9
    %p173 = scmp.lt.s32.totalorder %s9, 3
    %p174 = pnand %p172, %p173
    %p175 = pneg %p174
    // Predicated region
    $region29: #{tpu_custom_call.1} parent=5 // pred_check
      _
    $region30: #{tpu_custom_call.1} parent=5 // pred_check_branch
      %177 = sbr.rel (%p174) target = $region32
    $region31: #{tpu_custom_call.1} parent=5 // pred_region
      %s178 = ssub.s32 %s9, 1
      %p179 = scmp.lt.s32.totalorder %s18, 1
      %s180 = scalar_select %p179, %s18, 1
      %p181 = scmp.lt.s32.totalorder %s19, 0
      %s182 = scalar_select %p181, %s19, 0
      %s183 = smul.addr %s180, 9
      %s184 = sadd.s32 %s182, %s183
      %s185 = smul.addr %s184, 8
      %s186 = scalar_lea.vmem %s0, %s185
      %p187 = pneg %p49
      %p188 = pneg %p46
      %p189 = scmp.lt.s32.totalorder %s19, 0
      %s190 = scalar_select %p189, %s19, 0
      %s191 = smul.addr %s190, 8
      %s192 = scalar_lea.vmem %s1, %s191
      %p193 = pneg %p75
      %p194 = pneg %p72
      %p195 = scmp.lt.s32.totalorder %s19, 0
      %s196 = scalar_select %p195, %s19, 0
      %s197 = scalar_lea.vmem %s2, %s196
      %p198 = pneg %p101
      %p199 = pneg %p98
      %p200 = pneg %p129
      %p201 = pneg %p126
      %p202 = scmp.lt.s32.totalorder %s18, 1
      %s203 = scalar_select %p202, %s18, 1
      %p204 = scmp.lt.s32.totalorder %s19, 0
      %s205 = scalar_select %p204, %s19, 0
      %s206 = smul.addr %s203, 9
      %s207 = sadd.s32 %s205, %s206
      %s208 = smul.addr %s207, 8
      %s209 = scalar_lea.vmem %s3, %s208
      %p210 = scmp.lt.s32.totalorder %s18, 1
      %s211 = scalar_select %p210, %s18, 1
      %p212 = scmp.lt.s32.totalorder %s19, 0
      %s213 = scalar_select %p212, %s19, 0
      %s214 = smul.addr %s211, 9
      %s215 = sadd.s32 %s213, %s214
      %s216 = smul.addr %s215, 8
      %s217 = scalar_lea.vmem %s0, %s216
      %p218 = scmp.lt.s32.totalorder %s19, 0
      %s219 = scalar_select %p218, %s19, 0
      %s220 = smul.addr %s219, 8
      %s221 = scalar_lea.vmem %s1, %s220
      %p222 = scmp.lt.s32.totalorder %s19, 0
      %s223 = scalar_select %p222, %s19, 0
      %s224 = scalar_lea.vmem %s2, %s223
      %p225 = scmp.lt.s32.totalorder %s18, 1
      %s226 = scalar_select %p225, %s18, 1
      %p227 = scmp.lt.s32.totalorder %s19, 0
      %s228 = scalar_select %p227, %s19, 0
      %s229 = smul.addr %s226, 9
      %s230 = sadd.s32 %s228, %s229
      %s231 = smul.addr %s230, 8
      %s232 = scalar_lea.vmem %s3, %s231
      %v233 = vld [vmem:[%s217] sm:$0x3]
      %234 = vst [vmem:[%s232] sm:$0x3] %v233
      %235 = vst [vmem:[#allocation2] sm:$0xff] 0.0
      %236 = vst [vmem:[#allocation2 + $0x18] sm:$0xff] 0.0
      %237 = vst [vmem:[#allocation2 + $0x30] sm:$0xff] 0.0
      %238 = vst [vmem:[#allocation2 + $0x48] sm:$0xff] 0.0
      %239 = vst [vmem:[#allocation2 + $0x60] sm:$0xff] 0.0
      %240 = vst [vmem:[#allocation2 + $0x78] sm:$0xff] 0.0
      %241 = vst [vmem:[#allocation2 + $0x90] sm:$0xff] 0.0
      %242 = vst [vmem:[#allocation2 + $0xa8] sm:$0xff] 0.0
      %243 = vst [vmem:[#allocation2 + $0xc0] sm:$0xff] 0.0
      %244 = vst [vmem:[#allocation2 + $0xd8] sm:$0xff] 0.0
      %245 = vst [vmem:[#allocation2 + $0xf0] sm:$0xff] 0.0
      %246 = vst [vmem:[#allocation2 + $0x108] sm:$0xff] 0.0
      %247 = vst [vmem:[#allocation2 + $0x120] sm:$0xff] 0.0
      %248 = vst [vmem:[#allocation2 + $0x138] sm:$0xff] 0.0
      %249 = vst [vmem:[#allocation2 + $0x10] sm:$0xff] 0.0
      %250 = vst [vmem:[#allocation2 + $0x28] sm:$0xff] 0.0
      %251 = vst [vmem:[#allocation2 + $0x40] sm:$0xff] 0.0
      %252 = vst [vmem:[#allocation2 + $0x58] sm:$0xff] 0.0
      %253 = vst [vmem:[#allocation2 + $0x70] sm:$0xff] 0.0
      %254 = vst [vmem:[#allocation2 + $0x88] sm:$0xff] 0.0
      %255 = vst [vmem:[#allocation2 + $0xa0] sm:$0xff] 0.0
      %256 = vst [vmem:[#allocation2 + $0xb8] sm:$0xff] 0.0
      %257 = vst [vmem:[#allocation2 + $0xd0] sm:$0xff] 0.0
      %258 = vst [vmem:[#allocation2 + $0xe8] sm:$0xff] 0.0
      %259 = vst [vmem:[#allocation2 + $0x100] sm:$0xff] 0.0
      %260 = vst [vmem:[#allocation2 + $0x118] sm:$0xff] 0.0
      %261 = vst [vmem:[#allocation2 + $0x130] sm:$0xff] 0.0
      %262 = vst [vmem:[#allocation2 + $0x148] sm:$0xff] 0.0
      %263 = vst [vmem:[#allocation2 + $0x8] sm:$0xff] 0.0
      %264 = vst [vmem:[#allocation2 + $0x20] sm:$0xff] 0.0
      %265 = vst [vmem:[#allocation2 + $0x38] sm:$0xff] 0.0
      %s266 = scalar_lea.vmem [#allocation2], 264
      %267 = vst [vmem:[%s266 + $0x8] sm:$0xff] 0.0
      %268 = vst [vmem:[%s266 + $0x20] sm:$0xff] 0.0
      %269 = vst [vmem:[%s266 + $0x38] sm:$0xff] 0.0
      %v270 = vld [vmem:[%s217 + $0x2] sm:$0xff]
      %s271 = scalar_lea.vmem [#allocation2], 72
      %272 = vst [vmem:[%s271 + $0x8] sm:$0xff] %v270
      %v273 = vld [vmem:[%s217 + $0xa] sm:$0xff]
      %s274 = scalar_lea.vmem [#allocation2], 96
      %275 = vst [vmem:[%s274 + $0x8] sm:$0xff] %v273
      %v276 = vld [vmem:[%s217 + $0x12] sm:$0xff]
      %s277 = scalar_lea.vmem [#allocation2], 120
      %278 = vst [vmem:[%s277 + $0x8] sm:$0xff] %v276
      %v279 = vld [vmem:[%s217 + $0x1a] sm:$0xff]
      %s280 = scalar_lea.vmem [#allocation2], 144
      %281 = vst [vmem:[%s280 + $0x8] sm:$0xff] %v279
      %v282 = vld [vmem:[%s217 + $0x22] sm:$0xff]
      %s283 = scalar_lea.vmem [#allocation2], 168
      %284 = vst [vmem:[%s283 + $0x8] sm:$0xff] %v282
      %v285 = vld [vmem:[%s217 + $0x2a] sm:$0xff]
      %s286 = scalar_lea.vmem [#allocation2], 192
      %287 = vst [vmem:[%s286 + $0x8] sm:$0xff] %v285
      %v288 = vld [vmem:[%s217 + $0x32] sm:$0xff]
      %s289 = scalar_lea.vmem [#allocation2], 216
      %290 = vst [vmem:[%s289 + $0x8] sm:$0xff] %v288
      %v291 = vld [vmem:[%s217 + $0x3a] sm:$0xff]
      %s292 = scalar_lea.vmem [#allocation2], 240
      %293 = vst [vmem:[%s292 + $0x8] sm:$0xff] %v291
      %v294 = vld [vmem:[%s224] sm:$0x1]
      %v296 = vlaneseq
      %v297 = vshrl.u32 %v296, 7
      %v298 = vsub.s32 0, %v297
      %v299 = vrot.slane %v294, %v298
      %v301 = vld [vmem:[#allocation2 + $0x5] sm:$0xff]
      %v302 = vld [vmem:[#allocation2 + $0x1d] sm:$0xff]
      %v303 = vld [vmem:[#allocation2 + $0x35] sm:$0xff]
      %v304 = vld [vmem:[#allocation2 + $0x4d] sm:$0xff]
      %v305 = vld [vmem:[#allocation2 + $0x65] sm:$0xff]
      %v306 = vld [vmem:[#allocation2 + $0x7d] sm:$0xff]
      %v307 = vld [vmem:[#allocation2 + $0x95] sm:$0xff]
      %v308 = vld [vmem:[#allocation2 + $0xad] sm:$0xff]
      %v309 = vld [vmem:[%s221] sm:$0x1]
      %v310 = vlaneseq
      %v311 = vshrl.u32 %v310, 7
      %v312 = vsub.s32 0, %v311
      %v313 = vrot.slane %v309, %v312
      %v314 = vmul.f32 %v301, %v313
      %v315 = vmul.f32 %v302, %v313
      %v316 = vmul.f32 %v303, %v313
      %v317 = vmul.f32 %v304, %v313
      %v318 = vmul.f32 %v305, %v313
      %v319 = vmul.f32 %v306, %v313
      %v320 = vmul.f32 %v307, %v313
      %v321 = vmul.f32 %v308, %v313
      %v322 = vadd.f32 %v299, %v314
      %v323 = vadd.f32 %v299, %v315
      %v324 = vadd.f32 %v299, %v316
      %v325 = vadd.f32 %v299, %v317
      %v326 = vadd.f32 %v299, %v318
      %v327 = vadd.f32 %v299, %v319
      %v328 = vadd.f32 %v299, %v320
      %v329 = vadd.f32 %v299, %v321
      %s330 = scalar_lea.vmem [#allocation2], 24
      %v331 = vld [vmem:[%s330 + $0x5] sm:$0xff]
      %v332 = vld [vmem:[%s330 + $0x1d] sm:$0xff]
      %v333 = vld [vmem:[%s330 + $0x35] sm:$0xff]
      %v334 = vld [vmem:[%s330 + $0x4d] sm:$0xff]
      %v335 = vld [vmem:[%s330 + $0x65] sm:$0xff]
      %v336 = vld [vmem:[%s330 + $0x7d] sm:$0xff]
      %v337 = vld [vmem:[%s330 + $0x95] sm:$0xff]
      %v338 = vld [vmem:[%s330 + $0xad] sm:$0xff]
      %s339 = scalar_lea.vmem %s221, 8
      %v340 = vld [vmem:[%s339] sm:$0x1]
      %v341 = vlaneseq
      %v342 = vshrl.u32 %v341, 7
      %v343 = vsub.s32 0, %v342
      %v344 = vrot.slane %v340, %v343
      %v345 = vmul.f32 %v331, %v344
      %v346 = vmul.f32 %v332, %v344
      %v347 = vmul.f32 %v333, %v344
      %v348 = vmul.f32 %v334, %v344
      %v349 = vmul.f32 %v335, %v344
      %v350 = vmul.f32 %v336, %v344
      %v351 = vmul.f32 %v337, %v344
      %v352 = vmul.f32 %v338, %v344
      %v353 = vadd.f32 %v322, %v345
      %v354 = vadd.f32 %v323, %v346
      %v355 = vadd.f32 %v324, %v347
      %v356 = vadd.f32 %v325, %v348
      %v357 = vadd.f32 %v326, %v349
      %v358 = vadd.f32 %v327, %v350
      %v359 = vadd.f32 %v328, %v351
      %v360 = vadd.f32 %v329, %v352
      %s361 = scalar_lea.vmem [#allocation2], 48
      %v362 = vld [vmem:[%s361 + $0x5] sm:$0xff]
      %v363 = vld [vmem:[%s361 + $0x1d] sm:$0xff]
      %v364 = vld [vmem:[%s361 + $0x35] sm:$0xff]
      %v365 = vld [vmem:[%s361 + $0x4d] sm:$0xff]
      %v366 = vld [vmem:[%s361 + $0x65] sm:$0xff]
      %v367 = vld [vmem:[%s361 + $0x7d] sm:$0xff]
      %v368 = vld [vmem:[%s361 + $0x95] sm:$0xff]
      %v369 = vld [vmem:[%s361 + $0xad] sm:$0xff]
      %s370 = scalar_lea.vmem %s221, 16
      %v371 = vld [vmem:[%s370] sm:$0x1]
      %v372 = vlaneseq
      %v373 = vshrl.u32 %v372, 7
      %v374 = vsub.s32 0, %v373
      %v375 = vrot.slane %v371, %v374
      %v376 = vmul.f32 %v362, %v375
      %v377 = vmul.f32 %v363, %v375
      %v378 = vmul.f32 %v364, %v375
      %v379 = vmul.f32 %v365, %v375
      %v380 = vmul.f32 %v366, %v375
      %v381 = vmul.f32 %v367, %v375
      %v382 = vmul.f32 %v368, %v375
      %v383 = vmul.f32 %v369, %v375
      %v384 = vadd.f32 %v353, %v376
      %v385 = vadd.f32 %v354, %v377
      %v386 = vadd.f32 %v355, %v378
      %v387 = vadd.f32 %v356, %v379
      %v388 = vadd.f32 %v357, %v380
      %v389 = vadd.f32 %v358, %v381
      %v390 = vadd.f32 %v359, %v382
      %v391 = vadd.f32 %v360, %v383
      %v392 = vld [vmem:[%s271 + $0x5] sm:$0xff]
      %v393 = vld [vmem:[%s271 + $0x1d] sm:$0xff]
      %v394 = vld [vmem:[%s271 + $0x35] sm:$0xff]
      %v395 = vld [vmem:[%s271 + $0x4d] sm:$0xff]
      %v396 = vld [vmem:[%s271 + $0x65] sm:$0xff]
      %v397 = vld [vmem:[%s271 + $0x7d] sm:$0xff]
      %v398 = vld [vmem:[%s271 + $0x95] sm:$0xff]
      %v399 = vld [vmem:[%s271 + $0xad] sm:$0xff]
      %s400 = scalar_lea.vmem %s221, 24
      %v401 = vld [vmem:[%s400] sm:$0x1]
      %v402 = vlaneseq
      %v403 = vshrl.u32 %v402, 7
      %v404 = vsub.s32 0, %v403
      %v405 = vrot.slane %v401, %v404
      %v406 = vmul.f32 %v392, %v405
      %v407 = vmul.f32 %v393, %v405
      %v408 = vmul.f32 %v394, %v405
      %v409 = vmul.f32 %v395, %v405
      %v410 = vmul.f32 %v396, %v405
      %v411 = vmul.f32 %v397, %v405
      %v412 = vmul.f32 %v398, %v405
      %v413 = vmul.f32 %v399, %v405
      %v414 = vadd.f32 %v384, %v406
      %v415 = vadd.f32 %v385, %v407
      %v416 = vadd.f32 %v386, %v408
      %v417 = vadd.f32 %v387, %v409
      %v418 = vadd.f32 %v388, %v410
      %v419 = vadd.f32 %v389, %v411
      %v420 = vadd.f32 %v390, %v412
      %v421 = vadd.f32 %v391, %v413
      %v422 = vld [vmem:[%s274 + $0x5] sm:$0xff]
      %v423 = vld [vmem:[%s274 + $0x1d] sm:$0xff]
      %v424 = vld [vmem:[%s274 + $0x35] sm:$0xff]
      %v425 = vld [vmem:[%s274 + $0x4d] sm:$0xff]
      %v426 = vld [vmem:[%s274 + $0x65] sm:$0xff]
      %v427 = vld [vmem:[%s274 + $0x7d] sm:$0xff]
      %v428 = vld [vmem:[%s274 + $0x95] sm:$0xff]
      %v429 = vld [vmem:[%s274 + $0xad] sm:$0xff]
      %s430 = scalar_lea.vmem %s221, 32
      %v431 = vld [vmem:[%s430] sm:$0x1]
      %v432 = vlaneseq
      %v433 = vshrl.u32 %v432, 7
      %v434 = vsub.s32 0, %v433
      %v435 = vrot.slane %v431, %v434
      %v436 = vmul.f32 %v422, %v435
      %v437 = vmul.f32 %v423, %v435
      %v438 = vmul.f32 %v424, %v435
      %v439 = vmul.f32 %v425, %v435
      %v440 = vmul.f32 %v426, %v435
      %v441 = vmul.f32 %v427, %v435
      %v442 = vmul.f32 %v428, %v435
      %v443 = vmul.f32 %v429, %v435
      %v444 = vadd.f32 %v414, %v436
      %v445 = vadd.f32 %v415, %v437
      %v446 = vadd.f32 %v416, %v438
      %v447 = vadd.f32 %v417, %v439
      %v448 = vadd.f32 %v418, %v440
      %v449 = vadd.f32 %v419, %v441
      %v450 = vadd.f32 %v420, %v442
      %v451 = vadd.f32 %v421, %v443
      %v452 = vld [vmem:[%s277 + $0x5] sm:$0xff]
      %v453 = vld [vmem:[%s277 + $0x1d] sm:$0xff]
      %v454 = vld [vmem:[%s277 + $0x35] sm:$0xff]
      %v455 = vld [vmem:[%s277 + $0x4d] sm:$0xff]
      %v456 = vld [vmem:[%s277 + $0x65] sm:$0xff]
      %v457 = vld [vmem:[%s277 + $0x7d] sm:$0xff]
      %v458 = vld [vmem:[%s277 + $0x95] sm:$0xff]
      %v459 = vld [vmem:[%s277 + $0xad] sm:$0xff]
      %s460 = scalar_lea.vmem %s221, 40
      %v461 = vld [vmem:[%s460] sm:$0x1]
      %v462 = vlaneseq
      %v463 = vshrl.u32 %v462, 7
      %v464 = vsub.s32 0, %v463
      %v465 = vrot.slane %v461, %v464
      %v466 = vmul.f32 %v452, %v465
      %v467 = vmul.f32 %v453, %v465
      %v468 = vmul.f32 %v454, %v465
      %v469 = vmul.f32 %v455, %v465
      %v470 = vmul.f32 %v456, %v465
      %v471 = vmul.f32 %v457, %v465
      %v472 = vmul.f32 %v458, %v465
      %v473 = vmul.f32 %v459, %v465
      %v474 = vadd.f32 %v444, %v466
      %v475 = vadd.f32 %v445, %v467
      %v476 = vadd.f32 %v446, %v468
      %v477 = vadd.f32 %v447, %v469
      %v478 = vadd.f32 %v448, %v470
      %v479 = vadd.f32 %v449, %v471
      %v480 = vadd.f32 %v450, %v472
      %v481 = vadd.f32 %v451, %v473
      %v482 = vld [vmem:[%s280 + $0x5] sm:$0xff]
      %v483 = vld [vmem:[%s280 + $0x1d] sm:$0xff]
      %v484 = vld [vmem:[%s280 + $0x35] sm:$0xff]
      %v485 = vld [vmem:[%s280 + $0x4d] sm:$0xff]
      %v486 = vld [vmem:[%s280 + $0x65] sm:$0xff]
      %v487 = vld [vmem:[%s280 + $0x7d] sm:$0xff]
      %v488 = vld [vmem:[%s280 + $0x95] sm:$0xff]
      %v489 = vld [vmem:[%s280 + $0xad] sm:$0xff]
      %s490 = scalar_lea.vmem %s221, 48
      %v491 = vld [vmem:[%s490] sm:$0x1]
      %v492 = vlaneseq
      %v493 = vshrl.u32 %v492, 7
      %v494 = vsub.s32 0, %v493
      %v495 = vrot.slane %v491, %v494
      %v496 = vmul.f32 %v482, %v495
      %v497 = vmul.f32 %v483, %v495
      %v498 = vmul.f32 %v484, %v495
      %v499 = vmul.f32 %v485, %v495
      %v500 = vmul.f32 %v486, %v495
      %v501 = vmul.f32 %v487, %v495
      %v502 = vmul.f32 %v488, %v495
      %v503 = vmul.f32 %v489, %v495
      %v504 = vadd.f32 %v474, %v496
      %v505 = vadd.f32 %v475, %v497
      %v506 = vadd.f32 %v476, %v498
      %v507 = vadd.f32 %v477, %v499
      %v508 = vadd.f32 %v478, %v500
      %v509 = vadd.f32 %v479, %v501
      %v510 = vadd.f32 %v480, %v502
      %v511 = vadd.f32 %v481, %v503
      %v512 = vld [vmem:[#allocation2 + $0x6] sm:$0xff]
      %v513 = vld [vmem:[#allocation2 + $0x1e] sm:$0xff]
      %v514 = vld [vmem:[#allocation2 + $0x36] sm:$0xff]
      %v515 = vld [vmem:[#allocation2 + $0x4e] sm:$0xff]
      %v516 = vld [vmem:[#allocation2 + $0x66] sm:$0xff]
      %v517 = vld [vmem:[#allocation2 + $0x7e] sm:$0xff]
      %v518 = vld [vmem:[#allocation2 + $0x96] sm:$0xff]
      %v519 = vld [vmem:[#allocation2 + $0xae] sm:$0xff]
      %v520 = vld [vmem:[%s221 + $0x1] sm:$0x1]
      %v521 = vlaneseq
      %v522 = vshrl.u32 %v521, 7
      %v523 = vsub.s32 0, %v522
      %v524 = vrot.slane %v520, %v523
      %v525 = vmul.f32 %v512, %v524
      %v526 = vmul.f32 %v513, %v524
      %v527 = vmul.f32 %v514, %v524
      %v528 = vmul.f32 %v515, %v524
      %v529 = vmul.f32 %v516, %v524
      %v530 = vmul.f32 %v517, %v524
      %v531 = vmul.f32 %v518, %v524
      %v532 = vmul.f32 %v519, %v524
      %v533 = vadd.f32 %v504, %v525
      %v534 = vadd.f32 %v505, %v526
      %v535 = vadd.f32 %v506, %v527
      %v536 = vadd.f32 %v507, %v528
      %v537 = vadd.f32 %v508, %v529
      %v538 = vadd.f32 %v509, %v530
      %v539 = vadd.f32 %v510, %v531
      %v540 = vadd.f32 %v511, %v532
      %v541 = vld [vmem:[%s330 + $0x6] sm:$0xff]
      %v542 = vld [vmem:[%s330 + $0x1e] sm:$0xff]
      %v543 = vld [vmem:[%s330 + $0x36] sm:$0xff]
      %v544 = vld [vmem:[%s330 + $0x4e] sm:$0xff]
      %v545 = vld [vmem:[%s330 + $0x66] sm:$0xff]
      %v546 = vld [vmem:[%s330 + $0x7e] sm:$0xff]
      %v547 = vld [vmem:[%s330 + $0x96] sm:$0xff]
      %v548 = vld [vmem:[%s330 + $0xae] sm:$0xff]
      %v549 = vld [vmem:[%s339 + $0x1] sm:$0x1]
      %v550 = vlaneseq
      %v551 = vshrl.u32 %v550, 7
      %v552 = vsub.s32 0, %v551
      %v553 = vrot.slane %v549, %v552
      %v554 = vmul.f32 %v541, %v553
      %v555 = vmul.f32 %v542, %v553
      %v556 = vmul.f32 %v543, %v553
      %v557 = vmul.f32 %v544, %v553
      %v558 = vmul.f32 %v545, %v553
      %v559 = vmul.f32 %v546, %v553
      %v560 = vmul.f32 %v547, %v553
      %v561 = vmul.f32 %v548, %v553
      %v562 = vadd.f32 %v533, %v554
      %v563 = vadd.f32 %v534, %v555
      %v564 = vadd.f32 %v535, %v556
      %v565 = vadd.f32 %v536, %v557
      %v566 = vadd.f32 %v537, %v558
      %v567 = vadd.f32 %v538, %v559
      %v568 = vadd.f32 %v539, %v560
      %v569 = vadd.f32 %v540, %v561
      %v570 = vld [vmem:[%s361 + $0x6] sm:$0xff]
      %v571 = vld [vmem:[%s361 + $0x1e] sm:$0xff]
      %v572 = vld [vmem:[%s361 + $0x36] sm:$0xff]
      %v573 = vld [vmem:[%s361 + $0x4e] sm:$0xff]
      %v574 = vld [vmem:[%s361 + $0x66] sm:$0xff]
      %v575 = vld [vmem:[%s361 + $0x7e] sm:$0xff]
      %v576 = vld [vmem:[%s361 + $0x96] sm:$0xff]
      %v577 = vld [vmem:[%s361 + $0xae] sm:$0xff]
      %v578 = vld [vmem:[%s370 + $0x1] sm:$0x1]
      %v579 = vlaneseq
      %v580 = vshrl.u32 %v579, 7
      %v581 = vsub.s32 0, %v580
      %v582 = vrot.slane %v578, %v581
      %v583 = vmul.f32 %v570, %v582
      %v584 = vmul.f32 %v571, %v582
      %v585 = vmul.f32 %v572, %v582
      %v586 = vmul.f32 %v573, %v582
      %v587 = vmul.f32 %v574, %v582
      %v588 = vmul.f32 %v575, %v582
      %v589 = vmul.f32 %v576, %v582
      %v590 = vmul.f32 %v577, %v582
      %v591 = vadd.f32 %v562, %v583
      %v592 = vadd.f32 %v563, %v584
      %v593 = vadd.f32 %v564, %v585
      %v594 = vadd.f32 %v565, %v586
      %v595 = vadd.f32 %v566, %v587
      %v596 = vadd.f32 %v567, %v588
      %v597 = vadd.f32 %v568, %v589
      %v598 = vadd.f32 %v569, %v590
      %v599 = vld [vmem:[%s271 + $0x6] sm:$0xff]
      %v600 = vld [vmem:[%s271 + $0x1e] sm:$0xff]
      %v601 = vld [vmem:[%s271 + $0x36] sm:$0xff]
      %v602 = vld [vmem:[%s271 + $0x4e] sm:$0xff]
      %v603 = vld [vmem:[%s271 + $0x66] sm:$0xff]
      %v604 = vld [vmem:[%s271 + $0x7e] sm:$0xff]
      %v605 = vld [vmem:[%s271 + $0x96] sm:$0xff]
      %v606 = vld [vmem:[%s271 + $0xae] sm:$0xff]
      %v607 = vld [vmem:[%s400 + $0x1] sm:$0x1]
      %v608 = vlaneseq
      %v609 = vshrl.u32 %v608, 7
      %v610 = vsub.s32 0, %v609
      %v611 = vrot.slane %v607, %v610
      %v612 = vmul.f32 %v599, %v611
      %v613 = vmul.f32 %v600, %v611
      %v614 = vmul.f32 %v601, %v611
      %v615 = vmul.f32 %v602, %v611
      %v616 = vmul.f32 %v603, %v611
      %v617 = vmul.f32 %v604, %v611
      %v618 = vmul.f32 %v605, %v611
      %v619 = vmul.f32 %v606, %v611
      %v620 = vadd.f32 %v591, %v612
      %v621 = vadd.f32 %v592, %v613
      %v622 = vadd.f32 %v593, %v614
      %v623 = vadd.f32 %v594, %v615
      %v624 = vadd.f32 %v595, %v616
      %v625 = vadd.f32 %v596, %v617
      %v626 = vadd.f32 %v597, %v618
      %v627 = vadd.f32 %v598, %v619
      %v628 = vld [vmem:[%s274 + $0x6] sm:$0xff]
      %v629 = vld [vmem:[%s274 + $0x1e] sm:$0xff]
      %v630 = vld [vmem:[%s274 + $0x36] sm:$0xff]
      %v631 = vld [vmem:[%s274 + $0x4e] sm:$0xff]
      %v632 = vld [vmem:[%s274 + $0x66] sm:$0xff]
      %v633 = vld [vmem:[%s274 + $0x7e] sm:$0xff]
      %v634 = vld [vmem:[%s274 + $0x96] sm:$0xff]
      %v635 = vld [vmem:[%s274 + $0xae] sm:$0xff]
      %v636 = vld [vmem:[%s430 + $0x1] sm:$0x1]
      %v637 = vlaneseq
      %v638 = vshrl.u32 %v637, 7
      %v639 = vsub.s32 0, %v638
      %v640 = vrot.slane %v636, %v639
      %v641 = vmul.f32 %v628, %v640
      %v642 = vmul.f32 %v629, %v640
      %v643 = vmul.f32 %v630, %v640
      %v644 = vmul.f32 %v631, %v640
      %v645 = vmul.f32 %v632, %v640
      %v646 = vmul.f32 %v633, %v640
      %v647 = vmul.f32 %v634, %v640
      %v648 = vmul.f32 %v635, %v640
      %v649 = vadd.f32 %v620, %v641
      %v650 = vadd.f32 %v621, %v642
      %v651 = vadd.f32 %v622, %v643
      %v652 = vadd.f32 %v623, %v644
      %v653 = vadd.f32 %v624, %v645
      %v654 = vadd.f32 %v625, %v646
      %v655 = vadd.f32 %v626, %v647
      %v656 = vadd.f32 %v627, %v648
      %v657 = vld [vmem:[%s277 + $0x6] sm:$0xff]
      %v658 = vld [vmem:[%s277 + $0x1e] sm:$0xff]
      %v659 = vld [vmem:[%s277 + $0x36] sm:$0xff]
      %v660 = vld [vmem:[%s277 + $0x4e] sm:$0xff]
      %v661 = vld [vmem:[%s277 + $0x66] sm:$0xff]
      %v662 = vld [vmem:[%s277 + $0x7e] sm:$0xff]
      %v663 = vld [vmem:[%s277 + $0x96] sm:$0xff]
      %v664 = vld [vmem:[%s277 + $0xae] sm:$0xff]
      %v665 = vld [vmem:[%s460 + $0x1] sm:$0x1]
      %v666 = vlaneseq
      %v667 = vshrl.u32 %v666, 7
      %v668 = vsub.s32 0, %v667
      %v669 = vrot.slane %v665, %v668
      %v670 = vmul.f32 %v657, %v669
      %v671 = vmul.f32 %v658, %v669
      %v672 = vmul.f32 %v659, %v669
      %v673 = vmul.f32 %v660, %v669
      %v674 = vmul.f32 %v661, %v669
      %v675 = vmul.f32 %v662, %v669
      %v676 = vmul.f32 %v663, %v669
      %v677 = vmul.f32 %v664, %v669
      %v678 = vadd.f32 %v649, %v670
      %v679 = vadd.f32 %v650, %v671
      %v680 = vadd.f32 %v651, %v672
      %v681 = vadd.f32 %v652, %v673
      %v682 = vadd.f32 %v653, %v674
      %v683 = vadd.f32 %v654, %v675
      %v684 = vadd.f32 %v655, %v676
      %v685 = vadd.f32 %v656, %v677
      %v686 = vld [vmem:[%s280 + $0x6] sm:$0xff]
      %v687 = vld [vmem:[%s280 + $0x1e] sm:$0xff]
      %v688 = vld [vmem:[%s280 + $0x36] sm:$0xff]
      %v689 = vld [vmem:[%s280 + $0x4e] sm:$0xff]
      %v690 = vld [vmem:[%s280 + $0x66] sm:$0xff]
      %v691 = vld [vmem:[%s280 + $0x7e] sm:$0xff]
      %v692 = vld [vmem:[%s280 + $0x96] sm:$0xff]
      %v693 = vld [vmem:[%s280 + $0xae] sm:$0xff]
      %v694 = vld [vmem:[%s490 + $0x1] sm:$0x1]
      %v695 = vlaneseq
      %v696 = vshrl.u32 %v695, 7
      %v697 = vsub.s32 0, %v696
      %v698 = vrot.slane %v694, %v697
      %v699 = vmul.f32 %v686, %v698
      %v700 = vmul.f32 %v687, %v698
      %v701 = vmul.f32 %v688, %v698
      %v702 = vmul.f32 %v689, %v698
      %v703 = vmul.f32 %v690, %v698
      %v704 = vmul.f32 %v691, %v698
      %v705 = vmul.f32 %v692, %v698
      %v706 = vmul.f32 %v693, %v698
      %v707 = vadd.f32 %v678, %v699
      %v708 = vadd.f32 %v679, %v700
      %v709 = vadd.f32 %v680, %v701
      %v710 = vadd.f32 %v681, %v702
      %v711 = vadd.f32 %v682, %v703
      %v712 = vadd.f32 %v683, %v704
      %v713 = vadd.f32 %v684, %v705
      %v714 = vadd.f32 %v685, %v706
      %v715 = vld [vmem:[#allocation2 + $0x7] sm:$0xff]
      %v716 = vld [vmem:[#allocation2 + $0x1f] sm:$0xff]
      %v717 = vld [vmem:[#allocation2 + $0x37] sm:$0xff]
      %v718 = vld [vmem:[#allocation2 + $0x4f] sm:$0xff]
      %v719 = vld [vmem:[#allocation2 + $0x67] sm:$0xff]
      %v720 = vld [vmem:[#allocation2 + $0x7f] sm:$0xff]
      %v721 = vld [vmem:[#allocation2 + $0x97] sm:$0xff]
      %v722 = vld [vmem:[#allocation2 + $0xaf] sm:$0xff]
      %v723 = vld [vmem:[%s221 + $0x2] sm:$0x1]
      %v724 = vlaneseq
      %v725 = vshrl.u32 %v724, 7
      %v726 = vsub.s32 0, %v725
      %v727 = vrot.slane %v723, %v726
      %v728 = vmul.f32 %v715, %v727
      %v729 = vmul.f32 %v716, %v727
      %v730 = vmul.f32 %v717, %v727
      %v731 = vmul.f32 %v718, %v727
      %v732 = vmul.f32 %v719, %v727
      %v733 = vmul.f32 %v720, %v727
      %v734 = vmul.f32 %v721, %v727
      %v735 = vmul.f32 %v722, %v727
      %v736 = vadd.f32 %v707, %v728
      %v737 = vadd.f32 %v708, %v729
      %v738 = vadd.f32 %v709, %v730
      %v739 = vadd.f32 %v710, %v731
      %v740 = vadd.f32 %v711, %v732
      %v741 = vadd.f32 %v712, %v733
      %v742 = vadd.f32 %v713, %v734
      %v743 = vadd.f32 %v714, %v735
      %v744 = vld [vmem:[%s330 + $0x7] sm:$0xff]
      %v745 = vld [vmem:[%s330 + $0x1f] sm:$0xff]
      %v746 = vld [vmem:[%s330 + $0x37] sm:$0xff]
      %v747 = vld [vmem:[%s330 + $0x4f] sm:$0xff]
      %v748 = vld [vmem:[%s330 + $0x67] sm:$0xff]
      %v749 = vld [vmem:[%s330 + $0x7f] sm:$0xff]
      %v750 = vld [vmem:[%s330 + $0x97] sm:$0xff]
      %v751 = vld [vmem:[%s330 + $0xaf] sm:$0xff]
      %v752 = vld [vmem:[%s339 + $0x2] sm:$0x1]
      %v753 = vlaneseq
      %v754 = vshrl.u32 %v753, 7
      %v755 = vsub.s32 0, %v754
      %v756 = vrot.slane %v752, %v755
      %v757 = vmul.f32 %v744, %v756
      %v758 = vmul.f32 %v745, %v756
      %v759 = vmul.f32 %v746, %v756
      %v760 = vmul.f32 %v747, %v756
      %v761 = vmul.f32 %v748, %v756
      %v762 = vmul.f32 %v749, %v756
      %v763 = vmul.f32 %v750, %v756
      %v764 = vmul.f32 %v751, %v756
      %v765 = vadd.f32 %v736, %v757
      %v766 = vadd.f32 %v737, %v758
      %v767 = vadd.f32 %v738, %v759
      %v768 = vadd.f32 %v739, %v760
      %v769 = vadd.f32 %v740, %v761
      %v770 = vadd.f32 %v741, %v762
      %v771 = vadd.f32 %v742, %v763
      %v772 = vadd.f32 %v743, %v764
      %v773 = vld [vmem:[%s361 + $0x7] sm:$0xff]
      %v774 = vld [vmem:[%s361 + $0x1f] sm:$0xff]
      %v775 = vld [vmem:[%s361 + $0x37] sm:$0xff]
      %v776 = vld [vmem:[%s361 + $0x4f] sm:$0xff]
      %v777 = vld [vmem:[%s361 + $0x67] sm:$0xff]
      %v778 = vld [vmem:[%s361 + $0x7f] sm:$0xff]
      %v779 = vld [vmem:[%s361 + $0x97] sm:$0xff]
      %v780 = vld [vmem:[%s361 + $0xaf] sm:$0xff]
      %v781 = vld [vmem:[%s370 + $0x2] sm:$0x1]
      %v782 = vlaneseq
      %v783 = vshrl.u32 %v782, 7
      %v784 = vsub.s32 0, %v783
      %v785 = vrot.slane %v781, %v784
      %v786 = vmul.f32 %v773, %v785
      %v787 = vmul.f32 %v774, %v785
      %v788 = vmul.f32 %v775, %v785
      %v789 = vmul.f32 %v776, %v785
      %v790 = vmul.f32 %v777, %v785
      %v791 = vmul.f32 %v778, %v785
      %v792 = vmul.f32 %v779, %v785
      %v793 = vmul.f32 %v780, %v785
      %v794 = vadd.f32 %v765, %v786
      %v795 = vadd.f32 %v766, %v787
      %v796 = vadd.f32 %v767, %v788
      %v797 = vadd.f32 %v768, %v789
      %v798 = vadd.f32 %v769, %v790
      %v799 = vadd.f32 %v770, %v791
      %v800 = vadd.f32 %v771, %v792
      %v801 = vadd.f32 %v772, %v793
      %v802 = vld [vmem:[%s271 + $0x7] sm:$0xff]
      %v803 = vld [vmem:[%s271 + $0x1f] sm:$0xff]
      %v804 = vld [vmem:[%s271 + $0x37] sm:$0xff]
      %v805 = vld [vmem:[%s271 + $0x4f] sm:$0xff]
      %v806 = vld [vmem:[%s271 + $0x67] sm:$0xff]
      %v807 = vld [vmem:[%s271 + $0x7f] sm:$0xff]
      %v808 = vld [vmem:[%s271 + $0x97] sm:$0xff]
      %v809 = vld [vmem:[%s271 + $0xaf] sm:$0xff]
      %v810 = vld [vmem:[%s400 + $0x2] sm:$0x1]
      %v811 = vlaneseq
      %v812 = vshrl.u32 %v811, 7
      %v813 = vsub.s32 0, %v812
      %v814 = vrot.slane %v810, %v813
      %v815 = vmul.f32 %v802, %v814
      %v816 = vmul.f32 %v803, %v814
      %v817 = vmul.f32 %v804, %v814
      %v818 = vmul.f32 %v805, %v814
      %v819 = vmul.f32 %v806, %v814
      %v820 = vmul.f32 %v807, %v814
      %v821 = vmul.f32 %v808, %v814
      %v822 = vmul.f32 %v809, %v814
      %v823 = vadd.f32 %v794, %v815
      %v824 = vadd.f32 %v795, %v816
      %v825 = vadd.f32 %v796, %v817
      %v826 = vadd.f32 %v797, %v818
      %v827 = vadd.f32 %v798, %v819
      %v828 = vadd.f32 %v799, %v820
      %v829 = vadd.f32 %v800, %v821
      %v830 = vadd.f32 %v801, %v822
      %v831 = vld [vmem:[%s274 + $0x7] sm:$0xff]
      %v832 = vld [vmem:[%s274 + $0x1f] sm:$0xff]
      %v833 = vld [vmem:[%s274 + $0x37] sm:$0xff]
      %v834 = vld [vmem:[%s274 + $0x4f] sm:$0xff]
      %v835 = vld [vmem:[%s274 + $0x67] sm:$0xff]
      %v836 = vld [vmem:[%s274 + $0x7f] sm:$0xff]
      %v837 = vld [vmem:[%s274 + $0x97] sm:$0xff]
      %v838 = vld [vmem:[%s274 + $0xaf] sm:$0xff]
      %v839 = vld [vmem:[%s430 + $0x2] sm:$0x1]
      %v840 = vlaneseq
      %v841 = vshrl.u32 %v840, 7
      %v842 = vsub.s32 0, %v841
      %v843 = vrot.slane %v839, %v842
      %v844 = vmul.f32 %v831, %v843
      %v845 = vmul.f32 %v832, %v843
      %v846 = vmul.f32 %v833, %v843
      %v847 = vmul.f32 %v834, %v843
      %v848 = vmul.f32 %v835, %v843
      %v849 = vmul.f32 %v836, %v843
      %v850 = vmul.f32 %v837, %v843
      %v851 = vmul.f32 %v838, %v843
      %v852 = vadd.f32 %v823, %v844
      %v853 = vadd.f32 %v824, %v845
      %v854 = vadd.f32 %v825, %v846
      %v855 = vadd.f32 %v826, %v847
      %v856 = vadd.f32 %v827, %v848
      %v857 = vadd.f32 %v828, %v849
      %v858 = vadd.f32 %v829, %v850
      %v859 = vadd.f32 %v830, %v851
      %v860 = vld [vmem:[%s277 + $0x7] sm:$0xff]
      %v861 = vld [vmem:[%s277 + $0x1f] sm:$0xff]
      %v862 = vld [vmem:[%s277 + $0x37] sm:$0xff]
      %v863 = vld [vmem:[%s277 + $0x4f] sm:$0xff]
      %v864 = vld [vmem:[%s277 + $0x67] sm:$0xff]
      %v865 = vld [vmem:[%s277 + $0x7f] sm:$0xff]
      %v866 = vld [vmem:[%s277 + $0x97] sm:$0xff]
      %v867 = vld [vmem:[%s277 + $0xaf] sm:$0xff]
      %v868 = vld [vmem:[%s460 + $0x2] sm:$0x1]
      %v869 = vlaneseq
      %v870 = vshrl.u32 %v869, 7
      %v871 = vsub.s32 0, %v870
      %v872 = vrot.slane %v868, %v871
      %v873 = vmul.f32 %v860, %v872
      %v874 = vmul.f32 %v861, %v872
      %v875 = vmul.f32 %v862, %v872
      %v876 = vmul.f32 %v863, %v872
      %v877 = vmul.f32 %v864, %v872
      %v878 = vmul.f32 %v865, %v872
      %v879 = vmul.f32 %v866, %v872
      %v880 = vmul.f32 %v867, %v872
      %v881 = vadd.f32 %v852, %v873
      %v882 = vadd.f32 %v853, %v874
      %v883 = vadd.f32 %v854, %v875
      %v884 = vadd.f32 %v855, %v876
      %v885 = vadd.f32 %v856, %v877
      %v886 = vadd.f32 %v857, %v878
      %v887 = vadd.f32 %v858, %v879
      %v888 = vadd.f32 %v859, %v880
      %v889 = vld [vmem:[%s280 + $0x7] sm:$0xff]
      %v890 = vld [vmem:[%s280 + $0x1f] sm:$0xff]
      %v891 = vld [vmem:[%s280 + $0x37] sm:$0xff]
      %v892 = vld [vmem:[%s280 + $0x4f] sm:$0xff]
      %v893 = vld [vmem:[%s280 + $0x67] sm:$0xff]
      %v894 = vld [vmem:[%s280 + $0x7f] sm:$0xff]
      %v895 = vld [vmem:[%s280 + $0x97] sm:$0xff]
      %v896 = vld [vmem:[%s280 + $0xaf] sm:$0xff]
      %v897 = vld [vmem:[%s490 + $0x2] sm:$0x1]
      %v898 = vlaneseq
      %v899 = vshrl.u32 %v898, 7
      %v900 = vsub.s32 0, %v899
      %v901 = vrot.slane %v897, %v900
      %v902 = vmul.f32 %v889, %v901
      %v903 = vmul.f32 %v890, %v901
      %v904 = vmul.f32 %v891, %v901
      %v905 = vmul.f32 %v892, %v901
      %v906 = vmul.f32 %v893, %v901
      %v907 = vmul.f32 %v894, %v901
      %v908 = vmul.f32 %v895, %v901
      %v909 = vmul.f32 %v896, %v901
      %v910 = vadd.f32 %v881, %v902
      %v911 = vadd.f32 %v882, %v903
      %v912 = vadd.f32 %v883, %v904
      %v913 = vadd.f32 %v884, %v905
      %v914 = vadd.f32 %v885, %v906
      %v915 = vadd.f32 %v886, %v907
      %v916 = vadd.f32 %v887, %v908
      %v917 = vadd.f32 %v888, %v909
      %v918 = vld [vmem:[#allocation2 + $0x8] sm:$0xff]
      %v919 = vld [vmem:[#allocation2 + $0x20] sm:$0xff]
      %v920 = vld [vmem:[#allocation2 + $0x38] sm:$0xff]
      %v921 = vld [vmem:[#allocation2 + $0x50] sm:$0xff]
      %v922 = vld [vmem:[#allocation2 + $0x68] sm:$0xff]
      %v923 = vld [vmem:[#allocation2 + $0x80] sm:$0xff]
      %v924 = vld [vmem:[#allocation2 + $0x98] sm:$0xff]
      %v925 = vld [vmem:[#allocation2 + $0xb0] sm:$0xff]
      %v926 = vld [vmem:[%s221 + $0x3] sm:$0x1]
      %v927 = vlaneseq
      %v928 = vshrl.u32 %v927, 7
      %v929 = vsub.s32 0, %v928
      %v930 = vrot.slane %v926, %v929
      %v931 = vmul.f32 %v918, %v930
      %v932 = vmul.f32 %v919, %v930
      %v933 = vmul.f32 %v920, %v930
      %v934 = vmul.f32 %v921, %v930
      %v935 = vmul.f32 %v922, %v930
      %v936 = vmul.f32 %v923, %v930
      %v937 = vmul.f32 %v924, %v930
      %v938 = vmul.f32 %v925, %v930
      %v939 = vadd.f32 %v910, %v931
      %v940 = vadd.f32 %v911, %v932
      %v941 = vadd.f32 %v912, %v933
      %v942 = vadd.f32 %v913, %v934
      %v943 = vadd.f32 %v914, %v935
      %v944 = vadd.f32 %v915, %v936
      %v945 = vadd.f32 %v916, %v937
      %v946 = vadd.f32 %v917, %v938
      %v947 = vld [vmem:[%s330 + $0x8] sm:$0xff]
      %v948 = vld [vmem:[%s330 + $0x20] sm:$0xff]
      %v949 = vld [vmem:[%s330 + $0x38] sm:$0xff]
      %v950 = vld [vmem:[%s330 + $0x50] sm:$0xff]
      %v951 = vld [vmem:[%s330 + $0x68] sm:$0xff]
      %v952 = vld [vmem:[%s330 + $0x80] sm:$0xff]
      %v953 = vld [vmem:[%s330 + $0x98] sm:$0xff]
      %v954 = vld [vmem:[%s330 + $0xb0] sm:$0xff]
      %v955 = vld [vmem:[%s339 + $0x3] sm:$0x1]
      %v956 = vlaneseq
      %v957 = vshrl.u32 %v956, 7
      %v958 = vsub.s32 0, %v957
      %v959 = vrot.slane %v955, %v958
      %v960 = vmul.f32 %v947, %v959
      %v961 = vmul.f32 %v948, %v959
      %v962 = vmul.f32 %v949, %v959
      %v963 = vmul.f32 %v950, %v959
      %v964 = vmul.f32 %v951, %v959
      %v965 = vmul.f32 %v952, %v959
      %v966 = vmul.f32 %v953, %v959
      %v967 = vmul.f32 %v954, %v959
      %v968 = vadd.f32 %v939, %v960
      %v969 = vadd.f32 %v940, %v961
      %v970 = vadd.f32 %v941, %v962
      %v971 = vadd.f32 %v942, %v963
      %v972 = vadd.f32 %v943, %v964
      %v973 = vadd.f32 %v944, %v965
      %v974 = vadd.f32 %v945, %v966
      %v975 = vadd.f32 %v946, %v967
      %v976 = vld [vmem:[%s361 + $0x8] sm:$0xff]
      %v977 = vld [vmem:[%s361 + $0x20] sm:$0xff]
      %v978 = vld [vmem:[%s361 + $0x38] sm:$0xff]
      %v979 = vld [vmem:[%s361 + $0x50] sm:$0xff]
      %v980 = vld [vmem:[%s361 + $0x68] sm:$0xff]
      %v981 = vld [vmem:[%s361 + $0x80] sm:$0xff]
      %v982 = vld [vmem:[%s361 + $0x98] sm:$0xff]
      %v983 = vld [vmem:[%s361 + $0xb0] sm:$0xff]
      %v984 = vld [vmem:[%s370 + $0x3] sm:$0x1]
      %v985 = vlaneseq
      %v986 = vshrl.u32 %v985, 7
      %v987 = vsub.s32 0, %v986
      %v988 = vrot.slane %v984, %v987
      %v989 = vmul.f32 %v976, %v988
      %v990 = vmul.f32 %v977, %v988
      %v991 = vmul.f32 %v978, %v988
      %v992 = vmul.f32 %v979, %v988
      %v993 = vmul.f32 %v980, %v988
      %v994 = vmul.f32 %v981, %v988
      %v995 = vmul.f32 %v982, %v988
      %v996 = vmul.f32 %v983, %v988
      %v997 = vadd.f32 %v968, %v989
      %v998 = vadd.f32 %v969, %v990
      %v999 = vadd.f32 %v970, %v991
      %v1000 = vadd.f32 %v971, %v992
      %v1001 = vadd.f32 %v972, %v993
      %v1002 = vadd.f32 %v973, %v994
      %v1003 = vadd.f32 %v974, %v995
      %v1004 = vadd.f32 %v975, %v996
      %v1005 = vld [vmem:[%s271 + $0x8] sm:$0xff]
      %v1006 = vld [vmem:[%s271 + $0x20] sm:$0xff]
      %v1007 = vld [vmem:[%s271 + $0x38] sm:$0xff]
      %v1008 = vld [vmem:[%s271 + $0x50] sm:$0xff]
      %v1009 = vld [vmem:[%s271 + $0x68] sm:$0xff]
      %v1010 = vld [vmem:[%s271 + $0x80] sm:$0xff]
      %v1011 = vld [vmem:[%s271 + $0x98] sm:$0xff]
      %v1012 = vld [vmem:[%s271 + $0xb0] sm:$0xff]
      %v1013 = vld [vmem:[%s400 + $0x3] sm:$0x1]
      %v1014 = vlaneseq
      %v1015 = vshrl.u32 %v1014, 7
      %v1016 = vsub.s32 0, %v1015
      %v1017 = vrot.slane %v1013, %v1016
      %v1018 = vmul.f32 %v1005, %v1017
      %v1019 = vmul.f32 %v1006, %v1017
      %v1020 = vmul.f32 %v1007, %v1017
      %v1021 = vmul.f32 %v1008, %v1017
      %v1022 = vmul.f32 %v1009, %v1017
      %v1023 = vmul.f32 %v1010, %v1017
      %v1024 = vmul.f32 %v1011, %v1017
      %v1025 = vmul.f32 %v1012, %v1017
      %v1026 = vadd.f32 %v997, %v1018
      %v1027 = vadd.f32 %v998, %v1019
      %v1028 = vadd.f32 %v999, %v1020
      %v1029 = vadd.f32 %v1000, %v1021
      %v1030 = vadd.f32 %v1001, %v1022
      %v1031 = vadd.f32 %v1002, %v1023
      %v1032 = vadd.f32 %v1003, %v1024
      %v1033 = vadd.f32 %v1004, %v1025
      %v1034 = vld [vmem:[%s274 + $0x8] sm:$0xff]
      %v1035 = vld [vmem:[%s274 + $0x20] sm:$0xff]
      %v1036 = vld [vmem:[%s274 + $0x38] sm:$0xff]
      %v1037 = vld [vmem:[%s274 + $0x50] sm:$0xff]
      %v1038 = vld [vmem:[%s274 + $0x68] sm:$0xff]
      %v1039 = vld [vmem:[%s274 + $0x80] sm:$0xff]
      %v1040 = vld [vmem:[%s274 + $0x98] sm:$0xff]
      %v1041 = vld [vmem:[%s274 + $0xb0] sm:$0xff]
      %v1042 = vld [vmem:[%s430 + $0x3] sm:$0x1]
      %v1043 = vlaneseq
      %v1044 = vshrl.u32 %v1043, 7
      %v1045 = vsub.s32 0, %v1044
      %v1046 = vrot.slane %v1042, %v1045
      %v1047 = vmul.f32 %v1034, %v1046
      %v1048 = vmul.f32 %v1035, %v1046
      %v1049 = vmul.f32 %v1036, %v1046
      %v1050 = vmul.f32 %v1037, %v1046
      %v1051 = vmul.f32 %v1038, %v1046
      %v1052 = vmul.f32 %v1039, %v1046
      %v1053 = vmul.f32 %v1040, %v1046
      %v1054 = vmul.f32 %v1041, %v1046
      %v1055 = vadd.f32 %v1026, %v1047
      %v1056 = vadd.f32 %v1027, %v1048
      %v1057 = vadd.f32 %v1028, %v1049
      %v1058 = vadd.f32 %v1029, %v1050
      %v1059 = vadd.f32 %v1030, %v1051
      %v1060 = vadd.f32 %v1031, %v1052
      %v1061 = vadd.f32 %v1032, %v1053
      %v1062 = vadd.f32 %v1033, %v1054
      %v1063 = vld [vmem:[%s277 + $0x8] sm:$0xff]
      %v1064 = vld [vmem:[%s277 + $0x20] sm:$0xff]
      %v1065 = vld [vmem:[%s277 + $0x38] sm:$0xff]
      %v1066 = vld [vmem:[%s277 + $0x50] sm:$0xff]
      %v1067 = vld [vmem:[%s277 + $0x68] sm:$0xff]
      %v1068 = vld [vmem:[%s277 + $0x80] sm:$0xff]
      %v1069 = vld [vmem:[%s277 + $0x98] sm:$0xff]
      %v1070 = vld [vmem:[%s277 + $0xb0] sm:$0xff]
      %v1071 = vld [vmem:[%s460 + $0x3] sm:$0x1]
      %v1072 = vlaneseq
      %v1073 = vshrl.u32 %v1072, 7
      %v1074 = vsub.s32 0, %v1073
      %v1075 = vrot.slane %v1071, %v1074
      %v1076 = vmul.f32 %v1063, %v1075
      %v1077 = vmul.f32 %v1064, %v1075
      %v1078 = vmul.f32 %v1065, %v1075
      %v1079 = vmul.f32 %v1066, %v1075
      %v1080 = vmul.f32 %v1067, %v1075
      %v1081 = vmul.f32 %v1068, %v1075
      %v1082 = vmul.f32 %v1069, %v1075
      %v1083 = vmul.f32 %v1070, %v1075
      %v1084 = vadd.f32 %v1055, %v1076
      %v1085 = vadd.f32 %v1056, %v1077
      %v1086 = vadd.f32 %v1057, %v1078
      %v1087 = vadd.f32 %v1058, %v1079
      %v1088 = vadd.f32 %v1059, %v1080
      %v1089 = vadd.f32 %v1060, %v1081
      %v1090 = vadd.f32 %v1061, %v1082
      %v1091 = vadd.f32 %v1062, %v1083
      %v1092 = vld [vmem:[%s280 + $0x8] sm:$0xff]
      %v1093 = vld [vmem:[%s280 + $0x20] sm:$0xff]
      %v1094 = vld [vmem:[%s280 + $0x38] sm:$0xff]
      %v1095 = vld [vmem:[%s280 + $0x50] sm:$0xff]
      %v1096 = vld [vmem:[%s280 + $0x68] sm:$0xff]
      %v1097 = vld [vmem:[%s280 + $0x80] sm:$0xff]
      %v1098 = vld [vmem:[%s280 + $0x98] sm:$0xff]
      %v1099 = vld [vmem:[%s280 + $0xb0] sm:$0xff]
      %v1100 = vld [vmem:[%s490 + $0x3] sm:$0x1]
      %v1101 = vlaneseq
      %v1102 = vshrl.u32 %v1101, 7
      %v1103 = vsub.s32 0, %v1102
      %v1104 = vrot.slane %v1100, %v1103
      %v1105 = vmul.f32 %v1092, %v1104
      %v1106 = vmul.f32 %v1093, %v1104
      %v1107 = vmul.f32 %v1094, %v1104
      %v1108 = vmul.f32 %v1095, %v1104
      %v1109 = vmul.f32 %v1096, %v1104
      %v1110 = vmul.f32 %v1097, %v1104
      %v1111 = vmul.f32 %v1098, %v1104
      %v1112 = vmul.f32 %v1099, %v1104
      %v1113 = vadd.f32 %v1084, %v1105
      %v1114 = vadd.f32 %v1085, %v1106
      %v1115 = vadd.f32 %v1086, %v1107
      %v1116 = vadd.f32 %v1087, %v1108
      %v1117 = vadd.f32 %v1088, %v1109
      %v1118 = vadd.f32 %v1089, %v1110
      %v1119 = vadd.f32 %v1090, %v1111
      %v1120 = vadd.f32 %v1091, %v1112
      %v1121 = vld [vmem:[#allocation2 + $0x9] sm:$0xff]
      %v1122 = vld [vmem:[#allocation2 + $0x21] sm:$0xff]
      %v1123 = vld [vmem:[#allocation2 + $0x39] sm:$0xff]
      %v1124 = vld [vmem:[#allocation2 + $0x51] sm:$0xff]
      %v1125 = vld [vmem:[#allocation2 + $0x69] sm:$0xff]
      %v1126 = vld [vmem:[#allocation2 + $0x81] sm:$0xff]
      %v1127 = vld [vmem:[#allocation2 + $0x99] sm:$0xff]
      %v1128 = vld [vmem:[#allocation2 + $0xb1] sm:$0xff]
      %v1129 = vld [vmem:[%s221 + $0x4] sm:$0x1]
      %v1130 = vlaneseq
      %v1131 = vshrl.u32 %v1130, 7
      %v1132 = vsub.s32 0, %v1131
      %v1133 = vrot.slane %v1129, %v1132
      %v1134 = vmul.f32 %v1121, %v1133
      %v1135 = vmul.f32 %v1122, %v1133
      %v1136 = vmul.f32 %v1123, %v1133
      %v1137 = vmul.f32 %v1124, %v1133
      %v1138 = vmul.f32 %v1125, %v1133
      %v1139 = vmul.f32 %v1126, %v1133
      %v1140 = vmul.f32 %v1127, %v1133
      %v1141 = vmul.f32 %v1128, %v1133
      %v1142 = vadd.f32 %v1113, %v1134
      %v1143 = vadd.f32 %v1114, %v1135
      %v1144 = vadd.f32 %v1115, %v1136
      %v1145 = vadd.f32 %v1116, %v1137
      %v1146 = vadd.f32 %v1117, %v1138
      %v1147 = vadd.f32 %v1118, %v1139
      %v1148 = vadd.f32 %v1119, %v1140
      %v1149 = vadd.f32 %v1120, %v1141
      %v1150 = vld [vmem:[%s330 + $0x9] sm:$0xff]
      %v1151 = vld [vmem:[%s330 + $0x21] sm:$0xff]
      %v1152 = vld [vmem:[%s330 + $0x39] sm:$0xff]
      %v1153 = vld [vmem:[%s330 + $0x51] sm:$0xff]
      %v1154 = vld [vmem:[%s330 + $0x69] sm:$0xff]
      %v1155 = vld [vmem:[%s330 + $0x81] sm:$0xff]
      %v1156 = vld [vmem:[%s330 + $0x99] sm:$0xff]
      %v1157 = vld [vmem:[%s330 + $0xb1] sm:$0xff]
      %v1158 = vld [vmem:[%s339 + $0x4] sm:$0x1]
      %v1159 = vlaneseq
      %v1160 = vshrl.u32 %v1159, 7
      %v1161 = vsub.s32 0, %v1160
      %v1162 = vrot.slane %v1158, %v1161
      %v1163 = vmul.f32 %v1150, %v1162
      %v1164 = vmul.f32 %v1151, %v1162
      %v1165 = vmul.f32 %v1152, %v1162
      %v1166 = vmul.f32 %v1153, %v1162
      %v1167 = vmul.f32 %v1154, %v1162
      %v1168 = vmul.f32 %v1155, %v1162
      %v1169 = vmul.f32 %v1156, %v1162
      %v1170 = vmul.f32 %v1157, %v1162
      %v1171 = vadd.f32 %v1142, %v1163
      %v1172 = vadd.f32 %v1143, %v1164
      %v1173 = vadd.f32 %v1144, %v1165
      %v1174 = vadd.f32 %v1145, %v1166
      %v1175 = vadd.f32 %v1146, %v1167
      %v1176 = vadd.f32 %v1147, %v1168
      %v1177 = vadd.f32 %v1148, %v1169
      %v1178 = vadd.f32 %v1149, %v1170
      %v1179 = vld [vmem:[%s361 + $0x9] sm:$0xff]
      %v1180 = vld [vmem:[%s361 + $0x21] sm:$0xff]
      %v1181 = vld [vmem:[%s361 + $0x39] sm:$0xff]
      %v1182 = vld [vmem:[%s361 + $0x51] sm:$0xff]
      %v1183 = vld [vmem:[%s361 + $0x69] sm:$0xff]
      %v1184 = vld [vmem:[%s361 + $0x81] sm:$0xff]
      %v1185 = vld [vmem:[%s361 + $0x99] sm:$0xff]
      %v1186 = vld [vmem:[%s361 + $0xb1] sm:$0xff]
      %v1187 = vld [vmem:[%s370 + $0x4] sm:$0x1]
      %v1188 = vlaneseq
      %v1189 = vshrl.u32 %v1188, 7
      %v1190 = vsub.s32 0, %v1189
      %v1191 = vrot.slane %v1187, %v1190
      %v1192 = vmul.f32 %v1179, %v1191
      %v1193 = vmul.f32 %v1180, %v1191
      %v1194 = vmul.f32 %v1181, %v1191
      %v1195 = vmul.f32 %v1182, %v1191
      %v1196 = vmul.f32 %v1183, %v1191
      %v1197 = vmul.f32 %v1184, %v1191
      %v1198 = vmul.f32 %v1185, %v1191
      %v1199 = vmul.f32 %v1186, %v1191
      %v1200 = vadd.f32 %v1171, %v1192
      %v1201 = vadd.f32 %v1172, %v1193
      %v1202 = vadd.f32 %v1173, %v1194
      %v1203 = vadd.f32 %v1174, %v1195
      %v1204 = vadd.f32 %v1175, %v1196
      %v1205 = vadd.f32 %v1176, %v1197
      %v1206 = vadd.f32 %v1177, %v1198
      %v1207 = vadd.f32 %v1178, %v1199
      %v1208 = vld [vmem:[%s271 + $0x9] sm:$0xff]
      %v1209 = vld [vmem:[%s271 + $0x21] sm:$0xff]
      %v1210 = vld [vmem:[%s271 + $0x39] sm:$0xff]
      %v1211 = vld [vmem:[%s271 + $0x51] sm:$0xff]
      %v1212 = vld [vmem:[%s271 + $0x69] sm:$0xff]
      %v1213 = vld [vmem:[%s271 + $0x81] sm:$0xff]
      %v1214 = vld [vmem:[%s271 + $0x99] sm:$0xff]
      %v1215 = vld [vmem:[%s271 + $0xb1] sm:$0xff]
      %v1216 = vld [vmem:[%s400 + $0x4] sm:$0x1]
      %v1217 = vlaneseq
      %v1218 = vshrl.u32 %v1217, 7
      %v1219 = vsub.s32 0, %v1218
      %v1220 = vrot.slane %v1216, %v1219
      %v1221 = vmul.f32 %v1208, %v1220
      %v1222 = vmul.f32 %v1209, %v1220
      %v1223 = vmul.f32 %v1210, %v1220
      %v1224 = vmul.f32 %v1211, %v1220
      %v1225 = vmul.f32 %v1212, %v1220
      %v1226 = vmul.f32 %v1213, %v1220
      %v1227 = vmul.f32 %v1214, %v1220
      %v1228 = vmul.f32 %v1215, %v1220
      %v1229 = vadd.f32 %v1200, %v1221
      %v1230 = vadd.f32 %v1201, %v1222
      %v1231 = vadd.f32 %v1202, %v1223
      %v1232 = vadd.f32 %v1203, %v1224
      %v1233 = vadd.f32 %v1204, %v1225
      %v1234 = vadd.f32 %v1205, %v1226
      %v1235 = vadd.f32 %v1206, %v1227
      %v1236 = vadd.f32 %v1207, %v1228
      %v1237 = vld [vmem:[%s274 + $0x9] sm:$0xff]
      %v1238 = vld [vmem:[%s274 + $0x21] sm:$0xff]
      %v1239 = vld [vmem:[%s274 + $0x39] sm:$0xff]
      %v1240 = vld [vmem:[%s274 + $0x51] sm:$0xff]
      %v1241 = vld [vmem:[%s274 + $0x69] sm:$0xff]
      %v1242 = vld [vmem:[%s274 + $0x81] sm:$0xff]
      %v1243 = vld [vmem:[%s274 + $0x99] sm:$0xff]
      %v1244 = vld [vmem:[%s274 + $0xb1] sm:$0xff]
      %v1245 = vld [vmem:[%s430 + $0x4] sm:$0x1]
      %v1246 = vlaneseq
      %v1247 = vshrl.u32 %v1246, 7
      %v1248 = vsub.s32 0, %v1247
      %v1249 = vrot.slane %v1245, %v1248
      %v1250 = vmul.f32 %v1237, %v1249
      %v1251 = vmul.f32 %v1238, %v1249
      %v1252 = vmul.f32 %v1239, %v1249
      %v1253 = vmul.f32 %v1240, %v1249
      %v1254 = vmul.f32 %v1241, %v1249
      %v1255 = vmul.f32 %v1242, %v1249
      %v1256 = vmul.f32 %v1243, %v1249
      %v1257 = vmul.f32 %v1244, %v1249
      %v1258 = vadd.f32 %v1229, %v1250
      %v1259 = vadd.f32 %v1230, %v1251
      %v1260 = vadd.f32 %v1231, %v1252
      %v1261 = vadd.f32 %v1232, %v1253
      %v1262 = vadd.f32 %v1233, %v1254
      %v1263 = vadd.f32 %v1234, %v1255
      %v1264 = vadd.f32 %v1235, %v1256
      %v1265 = vadd.f32 %v1236, %v1257
      %v1266 = vld [vmem:[%s277 + $0x9] sm:$0xff]
      %v1267 = vld [vmem:[%s277 + $0x21] sm:$0xff]
      %v1268 = vld [vmem:[%s277 + $0x39] sm:$0xff]
      %v1269 = vld [vmem:[%s277 + $0x51] sm:$0xff]
      %v1270 = vld [vmem:[%s277 + $0x69] sm:$0xff]
      %v1271 = vld [vmem:[%s277 + $0x81] sm:$0xff]
      %v1272 = vld [vmem:[%s277 + $0x99] sm:$0xff]
      %v1273 = vld [vmem:[%s277 + $0xb1] sm:$0xff]
      %v1274 = vld [vmem:[%s460 + $0x4] sm:$0x1]
      %v1275 = vlaneseq
      %v1276 = vshrl.u32 %v1275, 7
      %v1277 = vsub.s32 0, %v1276
      %v1278 = vrot.slane %v1274, %v1277
      %v1279 = vmul.f32 %v1266, %v1278
      %v1280 = vmul.f32 %v1267, %v1278
      %v1281 = vmul.f32 %v1268, %v1278
      %v1282 = vmul.f32 %v1269, %v1278
      %v1283 = vmul.f32 %v1270, %v1278
      %v1284 = vmul.f32 %v1271, %v1278
      %v1285 = vmul.f32 %v1272, %v1278
      %v1286 = vmul.f32 %v1273, %v1278
      %v1287 = vadd.f32 %v1258, %v1279
      %v1288 = vadd.f32 %v1259, %v1280
      %v1289 = vadd.f32 %v1260, %v1281
      %v1290 = vadd.f32 %v1261, %v1282
      %v1291 = vadd.f32 %v1262, %v1283
      %v1292 = vadd.f32 %v1263, %v1284
      %v1293 = vadd.f32 %v1264, %v1285
      %v1294 = vadd.f32 %v1265, %v1286
      %v1295 = vld [vmem:[%s280 + $0x9] sm:$0xff]
      %v1296 = vld [vmem:[%s280 + $0x21] sm:$0xff]
      %v1297 = vld [vmem:[%s280 + $0x39] sm:$0xff]
      %v1298 = vld [vmem:[%s280 + $0x51] sm:$0xff]
      %v1299 = vld [vmem:[%s280 + $0x69] sm:$0xff]
      %v1300 = vld [vmem:[%s280 + $0x81] sm:$0xff]
      %v1301 = vld [vmem:[%s280 + $0x99] sm:$0xff]
      %v1302 = vld [vmem:[%s280 + $0xb1] sm:$0xff]
      %v1303 = vld [vmem:[%s490 + $0x4] sm:$0x1]
      %v1304 = vlaneseq
      %v1305 = vshrl.u32 %v1304, 7
      %v1306 = vsub.s32 0, %v1305
      %v1307 = vrot.slane %v1303, %v1306
      %v1308 = vmul.f32 %v1295, %v1307
      %v1309 = vmul.f32 %v1296, %v1307
      %v1310 = vmul.f32 %v1297, %v1307
      %v1311 = vmul.f32 %v1298, %v1307
      %v1312 = vmul.f32 %v1299, %v1307
      %v1313 = vmul.f32 %v1300, %v1307
      %v1314 = vmul.f32 %v1301, %v1307
      %v1315 = vmul.f32 %v1302, %v1307
      %v1316 = vadd.f32 %v1287, %v1308
      %v1317 = vadd.f32 %v1288, %v1309
      %v1318 = vadd.f32 %v1289, %v1310
      %v1319 = vadd.f32 %v1290, %v1311
      %v1320 = vadd.f32 %v1291, %v1312
      %v1321 = vadd.f32 %v1292, %v1313
      %v1322 = vadd.f32 %v1293, %v1314
      %v1323 = vadd.f32 %v1294, %v1315
      %v1324 = vld [vmem:[#allocation2 + $0xa] sm:$0xff]
      %v1325 = vld [vmem:[#allocation2 + $0x22] sm:$0xff]
      %v1326 = vld [vmem:[#allocation2 + $0x3a] sm:$0xff]
      %v1327 = vld [vmem:[#allocation2 + $0x52] sm:$0xff]
      %v1328 = vld [vmem:[#allocation2 + $0x6a] sm:$0xff]
      %v1329 = vld [vmem:[#allocation2 + $0x82] sm:$0xff]
      %v1330 = vld [vmem:[#allocation2 + $0x9a] sm:$0xff]
      %v1331 = vld [vmem:[#allocation2 + $0xb2] sm:$0xff]
      %v1332 = vld [vmem:[%s221 + $0x5] sm:$0x1]
      %v1333 = vlaneseq
      %v1334 = vshrl.u32 %v1333, 7
      %v1335 = vsub.s32 0, %v1334
      %v1336 = vrot.slane %v1332, %v1335
      %v1337 = vmul.f32 %v1324, %v1336
      %v1338 = vmul.f32 %v1325, %v1336
      %v1339 = vmul.f32 %v1326, %v1336
      %v1340 = vmul.f32 %v1327, %v1336
      %v1341 = vmul.f32 %v1328, %v1336
      %v1342 = vmul.f32 %v1329, %v1336
      %v1343 = vmul.f32 %v1330, %v1336
      %v1344 = vmul.f32 %v1331, %v1336
      %v1345 = vadd.f32 %v1316, %v1337
      %v1346 = vadd.f32 %v1317, %v1338
      %v1347 = vadd.f32 %v1318, %v1339
      %v1348 = vadd.f32 %v1319, %v1340
      %v1349 = vadd.f32 %v1320, %v1341
      %v1350 = vadd.f32 %v1321, %v1342
      %v1351 = vadd.f32 %v1322, %v1343
      %v1352 = vadd.f32 %v1323, %v1344
      %v1353 = vld [vmem:[%s330 + $0xa] sm:$0xff]
      %v1354 = vld [vmem:[%s330 + $0x22] sm:$0xff]
      %v1355 = vld [vmem:[%s330 + $0x3a] sm:$0xff]
      %v1356 = vld [vmem:[%s330 + $0x52] sm:$0xff]
      %v1357 = vld [vmem:[%s330 + $0x6a] sm:$0xff]
      %v1358 = vld [vmem:[%s330 + $0x82] sm:$0xff]
      %v1359 = vld [vmem:[%s330 + $0x9a] sm:$0xff]
      %v1360 = vld [vmem:[%s330 + $0xb2] sm:$0xff]
      %v1361 = vld [vmem:[%s339 + $0x5] sm:$0x1]
      %v1362 = vlaneseq
      %v1363 = vshrl.u32 %v1362, 7
      %v1364 = vsub.s32 0, %v1363
      %v1365 = vrot.slane %v1361, %v1364
      %v1366 = vmul.f32 %v1353, %v1365
      %v1367 = vmul.f32 %v1354, %v1365
      %v1368 = vmul.f32 %v1355, %v1365
      %v1369 = vmul.f32 %v1356, %v1365
      %v1370 = vmul.f32 %v1357, %v1365
      %v1371 = vmul.f32 %v1358, %v1365
      %v1372 = vmul.f32 %v1359, %v1365
      %v1373 = vmul.f32 %v1360, %v1365
      %v1374 = vadd.f32 %v1345, %v1366
      %v1375 = vadd.f32 %v1346, %v1367
      %v1376 = vadd.f32 %v1347, %v1368
      %v1377 = vadd.f32 %v1348, %v1369
      %v1378 = vadd.f32 %v1349, %v1370
      %v1379 = vadd.f32 %v1350, %v1371
      %v1380 = vadd.f32 %v1351, %v1372
      %v1381 = vadd.f32 %v1352, %v1373
      %v1382 = vld [vmem:[%s361 + $0xa] sm:$0xff]
      %v1383 = vld [vmem:[%s361 + $0x22] sm:$0xff]
      %v1384 = vld [vmem:[%s361 + $0x3a] sm:$0xff]
      %v1385 = vld [vmem:[%s361 + $0x52] sm:$0xff]
      %v1386 = vld [vmem:[%s361 + $0x6a] sm:$0xff]
      %v1387 = vld [vmem:[%s361 + $0x82] sm:$0xff]
      %v1388 = vld [vmem:[%s361 + $0x9a] sm:$0xff]
      %v1389 = vld [vmem:[%s361 + $0xb2] sm:$0xff]
      %v1390 = vld [vmem:[%s370 + $0x5] sm:$0x1]
      %v1391 = vlaneseq
      %v1392 = vshrl.u32 %v1391, 7
      %v1393 = vsub.s32 0, %v1392
      %v1394 = vrot.slane %v1390, %v1393
      %v1395 = vmul.f32 %v1382, %v1394
      %v1396 = vmul.f32 %v1383, %v1394
      %v1397 = vmul.f32 %v1384, %v1394
      %v1398 = vmul.f32 %v1385, %v1394
      %v1399 = vmul.f32 %v1386, %v1394
      %v1400 = vmul.f32 %v1387, %v1394
      %v1401 = vmul.f32 %v1388, %v1394
      %v1402 = vmul.f32 %v1389, %v1394
      %v1403 = vadd.f32 %v1374, %v1395
      %v1404 = vadd.f32 %v1375, %v1396
      %v1405 = vadd.f32 %v1376, %v1397
      %v1406 = vadd.f32 %v1377, %v1398
      %v1407 = vadd.f32 %v1378, %v1399
      %v1408 = vadd.f32 %v1379, %v1400
      %v1409 = vadd.f32 %v1380, %v1401
      %v1410 = vadd.f32 %v1381, %v1402
      %v1411 = vld [vmem:[%s271 + $0xa] sm:$0xff]
      %v1412 = vld [vmem:[%s271 + $0x22] sm:$0xff]
      %v1413 = vld [vmem:[%s271 + $0x3a] sm:$0xff]
      %v1414 = vld [vmem:[%s271 + $0x52] sm:$0xff]
      %v1415 = vld [vmem:[%s271 + $0x6a] sm:$0xff]
      %v1416 = vld [vmem:[%s271 + $0x82] sm:$0xff]
      %v1417 = vld [vmem:[%s271 + $0x9a] sm:$0xff]
      %v1418 = vld [vmem:[%s271 + $0xb2] sm:$0xff]
      %v1419 = vld [vmem:[%s400 + $0x5] sm:$0x1]
      %v1420 = vlaneseq
      %v1421 = vshrl.u32 %v1420, 7
      %v1422 = vsub.s32 0, %v1421
      %v1423 = vrot.slane %v1419, %v1422
      %v1424 = vmul.f32 %v1411, %v1423
      %v1425 = vmul.f32 %v1412, %v1423
      %v1426 = vmul.f32 %v1413, %v1423
      %v1427 = vmul.f32 %v1414, %v1423
      %v1428 = vmul.f32 %v1415, %v1423
      %v1429 = vmul.f32 %v1416, %v1423
      %v1430 = vmul.f32 %v1417, %v1423
      %v1431 = vmul.f32 %v1418, %v1423
      %v1432 = vadd.f32 %v1403, %v1424
      %v1433 = vadd.f32 %v1404, %v1425
      %v1434 = vadd.f32 %v1405, %v1426
      %v1435 = vadd.f32 %v1406, %v1427
      %v1436 = vadd.f32 %v1407, %v1428
      %v1437 = vadd.f32 %v1408, %v1429
      %v1438 = vadd.f32 %v1409, %v1430
      %v1439 = vadd.f32 %v1410, %v1431
      %v1440 = vld [vmem:[%s274 + $0xa] sm:$0xff]
      %v1441 = vld [vmem:[%s274 + $0x22] sm:$0xff]
      %v1442 = vld [vmem:[%s274 + $0x3a] sm:$0xff]
      %v1443 = vld [vmem:[%s274 + $0x52] sm:$0xff]
      %v1444 = vld [vmem:[%s274 + $0x6a] sm:$0xff]
      %v1445 = vld [vmem:[%s274 + $0x82] sm:$0xff]
      %v1446 = vld [vmem:[%s274 + $0x9a] sm:$0xff]
      %v1447 = vld [vmem:[%s274 + $0xb2] sm:$0xff]
      %v1448 = vld [vmem:[%s430 + $0x5] sm:$0x1]
      %v1449 = vlaneseq
      %v1450 = vshrl.u32 %v1449, 7
      %v1451 = vsub.s32 0, %v1450
      %v1452 = vrot.slane %v1448, %v1451
      %v1453 = vmul.f32 %v1440, %v1452
      %v1454 = vmul.f32 %v1441, %v1452
      %v1455 = vmul.f32 %v1442, %v1452
      %v1456 = vmul.f32 %v1443, %v1452
      %v1457 = vmul.f32 %v1444, %v1452
      %v1458 = vmul.f32 %v1445, %v1452
      %v1459 = vmul.f32 %v1446, %v1452
      %v1460 = vmul.f32 %v1447, %v1452
      %v1461 = vadd.f32 %v1432, %v1453
      %v1462 = vadd.f32 %v1433, %v1454
      %v1463 = vadd.f32 %v1434, %v1455
      %v1464 = vadd.f32 %v1435, %v1456
      %v1465 = vadd.f32 %v1436, %v1457
      %v1466 = vadd.f32 %v1437, %v1458
      %v1467 = vadd.f32 %v1438, %v1459
      %v1468 = vadd.f32 %v1439, %v1460
      %v1469 = vld [vmem:[%s277 + $0xa] sm:$0xff]
      %v1470 = vld [vmem:[%s277 + $0x22] sm:$0xff]
      %v1471 = vld [vmem:[%s277 + $0x3a] sm:$0xff]
      %v1472 = vld [vmem:[%s277 + $0x52] sm:$0xff]
      %v1473 = vld [vmem:[%s277 + $0x6a] sm:$0xff]
      %v1474 = vld [vmem:[%s277 + $0x82] sm:$0xff]
      %v1475 = vld [vmem:[%s277 + $0x9a] sm:$0xff]
      %v1476 = vld [vmem:[%s277 + $0xb2] sm:$0xff]
      %v1477 = vld [vmem:[%s460 + $0x5] sm:$0x1]
      %v1478 = vlaneseq
      %v1479 = vshrl.u32 %v1478, 7
      %v1480 = vsub.s32 0, %v1479
      %v1481 = vrot.slane %v1477, %v1480
      %v1482 = vmul.f32 %v1469, %v1481
      %v1483 = vmul.f32 %v1470, %v1481
      %v1484 = vmul.f32 %v1471, %v1481
      %v1485 = vmul.f32 %v1472, %v1481
      %v1486 = vmul.f32 %v1473, %v1481
      %v1487 = vmul.f32 %v1474, %v1481
      %v1488 = vmul.f32 %v1475, %v1481
      %v1489 = vmul.f32 %v1476, %v1481
      %v1490 = vadd.f32 %v1461, %v1482
      %v1491 = vadd.f32 %v1462, %v1483
      %v1492 = vadd.f32 %v1463, %v1484
      %v1493 = vadd.f32 %v1464, %v1485
      %v1494 = vadd.f32 %v1465, %v1486
      %v1495 = vadd.f32 %v1466, %v1487
      %v1496 = vadd.f32 %v1467, %v1488
      %v1497 = vadd.f32 %v1468, %v1489
      %v1498 = vld [vmem:[%s280 + $0xa] sm:$0xff]
      %v1499 = vld [vmem:[%s280 + $0x22] sm:$0xff]
      %v1500 = vld [vmem:[%s280 + $0x3a] sm:$0xff]
      %v1501 = vld [vmem:[%s280 + $0x52] sm:$0xff]
      %v1502 = vld [vmem:[%s280 + $0x6a] sm:$0xff]
      %v1503 = vld [vmem:[%s280 + $0x82] sm:$0xff]
      %v1504 = vld [vmem:[%s280 + $0x9a] sm:$0xff]
      %v1505 = vld [vmem:[%s280 + $0xb2] sm:$0xff]
      %v1506 = vld [vmem:[%s490 + $0x5] sm:$0x1]
      %v1507 = vlaneseq
      %v1508 = vshrl.u32 %v1507, 7
      %v1509 = vsub.s32 0, %v1508
      %v1510 = vrot.slane %v1506, %v1509
      %v1511 = vmul.f32 %v1498, %v1510
      %v1512 = vmul.f32 %v1499, %v1510
      %v1513 = vmul.f32 %v1500, %v1510
      %v1514 = vmul.f32 %v1501, %v1510
      %v1515 = vmul.f32 %v1502, %v1510
      %v1516 = vmul.f32 %v1503, %v1510
      %v1517 = vmul.f32 %v1504, %v1510
      %v1518 = vmul.f32 %v1505, %v1510
      %v1519 = vadd.f32 %v1490, %v1511
      %v1520 = vadd.f32 %v1491, %v1512
      %v1521 = vadd.f32 %v1492, %v1513
      %v1522 = vadd.f32 %v1493, %v1514
      %v1523 = vadd.f32 %v1494, %v1515
      %v1524 = vadd.f32 %v1495, %v1516
      %v1525 = vadd.f32 %v1496, %v1517
      %v1526 = vadd.f32 %v1497, %v1518
      %v1527 = vld [vmem:[#allocation2 + $0xb] sm:$0xff]
      %v1528 = vld [vmem:[#allocation2 + $0x23] sm:$0xff]
      %v1529 = vld [vmem:[#allocation2 + $0x3b] sm:$0xff]
      %v1530 = vld [vmem:[#allocation2 + $0x53] sm:$0xff]
      %v1531 = vld [vmem:[#allocation2 + $0x6b] sm:$0xff]
      %v1532 = vld [vmem:[#allocation2 + $0x83] sm:$0xff]
      %v1533 = vld [vmem:[#allocation2 + $0x9b] sm:$0xff]
      %v1534 = vld [vmem:[#allocation2 + $0xb3] sm:$0xff]
      %v1535 = vld [vmem:[%s221 + $0x6] sm:$0x1]
      %v1536 = vlaneseq
      %v1537 = vshrl.u32 %v1536, 7
      %v1538 = vsub.s32 0, %v1537
      %v1539 = vrot.slane %v1535, %v1538
      %v1540 = vmul.f32 %v1527, %v1539
      %v1541 = vmul.f32 %v1528, %v1539
      %v1542 = vmul.f32 %v1529, %v1539
      %v1543 = vmul.f32 %v1530, %v1539
      %v1544 = vmul.f32 %v1531, %v1539
      %v1545 = vmul.f32 %v1532, %v1539
      %v1546 = vmul.f32 %v1533, %v1539
      %v1547 = vmul.f32 %v1534, %v1539
      %v1548 = vadd.f32 %v1519, %v1540
      %v1549 = vadd.f32 %v1520, %v1541
      %v1550 = vadd.f32 %v1521, %v1542
      %v1551 = vadd.f32 %v1522, %v1543
      %v1552 = vadd.f32 %v1523, %v1544
      %v1553 = vadd.f32 %v1524, %v1545
      %v1554 = vadd.f32 %v1525, %v1546
      %v1555 = vadd.f32 %v1526, %v1547
      %v1556 = vld [vmem:[%s330 + $0xb] sm:$0xff]
      %v1557 = vld [vmem:[%s330 + $0x23] sm:$0xff]
      %v1558 = vld [vmem:[%s330 + $0x3b] sm:$0xff]
      %v1559 = vld [vmem:[%s330 + $0x53] sm:$0xff]
      %v1560 = vld [vmem:[%s330 + $0x6b] sm:$0xff]
      %v1561 = vld [vmem:[%s330 + $0x83] sm:$0xff]
      %v1562 = vld [vmem:[%s330 + $0x9b] sm:$0xff]
      %v1563 = vld [vmem:[%s330 + $0xb3] sm:$0xff]
      %v1564 = vld [vmem:[%s339 + $0x6] sm:$0x1]
      %v1565 = vlaneseq
      %v1566 = vshrl.u32 %v1565, 7
      %v1567 = vsub.s32 0, %v1566
      %v1568 = vrot.slane %v1564, %v1567
      %v1569 = vmul.f32 %v1556, %v1568
      %v1570 = vmul.f32 %v1557, %v1568
      %v1571 = vmul.f32 %v1558, %v1568
      %v1572 = vmul.f32 %v1559, %v1568
      %v1573 = vmul.f32 %v1560, %v1568
      %v1574 = vmul.f32 %v1561, %v1568
      %v1575 = vmul.f32 %v1562, %v1568
      %v1576 = vmul.f32 %v1563, %v1568
      %v1577 = vadd.f32 %v1548, %v1569
      %v1578 = vadd.f32 %v1549, %v1570
      %v1579 = vadd.f32 %v1550, %v1571
      %v1580 = vadd.f32 %v1551, %v1572
      %v1581 = vadd.f32 %v1552, %v1573
      %v1582 = vadd.f32 %v1553, %v1574
      %v1583 = vadd.f32 %v1554, %v1575
      %v1584 = vadd.f32 %v1555, %v1576
      %v1585 = vld [vmem:[%s361 + $0xb] sm:$0xff]
      %v1586 = vld [vmem:[%s361 + $0x23] sm:$0xff]
      %v1587 = vld [vmem:[%s361 + $0x3b] sm:$0xff]
      %v1588 = vld [vmem:[%s361 + $0x53] sm:$0xff]
      %v1589 = vld [vmem:[%s361 + $0x6b] sm:$0xff]
      %v1590 = vld [vmem:[%s361 + $0x83] sm:$0xff]
      %v1591 = vld [vmem:[%s361 + $0x9b] sm:$0xff]
      %v1592 = vld [vmem:[%s361 + $0xb3] sm:$0xff]
      %v1593 = vld [vmem:[%s370 + $0x6] sm:$0x1]
      %v1594 = vlaneseq
      %v1595 = vshrl.u32 %v1594, 7
      %v1596 = vsub.s32 0, %v1595
      %v1597 = vrot.slane %v1593, %v1596
      %v1598 = vmul.f32 %v1585, %v1597
      %v1599 = vmul.f32 %v1586, %v1597
      %v1600 = vmul.f32 %v1587, %v1597
      %v1601 = vmul.f32 %v1588, %v1597
      %v1602 = vmul.f32 %v1589, %v1597
      %v1603 = vmul.f32 %v1590, %v1597
      %v1604 = vmul.f32 %v1591, %v1597
      %v1605 = vmul.f32 %v1592, %v1597
      %v1606 = vadd.f32 %v1577, %v1598
      %v1607 = vadd.f32 %v1578, %v1599
      %v1608 = vadd.f32 %v1579, %v1600
      %v1609 = vadd.f32 %v1580, %v1601
      %v1610 = vadd.f32 %v1581, %v1602
      %v1611 = vadd.f32 %v1582, %v1603
      %v1612 = vadd.f32 %v1583, %v1604
      %v1613 = vadd.f32 %v1584, %v1605
      %v1614 = vld [vmem:[%s271 + $0xb] sm:$0xff]
      %v1615 = vld [vmem:[%s271 + $0x23] sm:$0xff]
      %v1616 = vld [vmem:[%s271 + $0x3b] sm:$0xff]
      %v1617 = vld [vmem:[%s271 + $0x53] sm:$0xff]
      %v1618 = vld [vmem:[%s271 + $0x6b] sm:$0xff]
      %v1619 = vld [vmem:[%s271 + $0x83] sm:$0xff]
      %v1620 = vld [vmem:[%s271 + $0x9b] sm:$0xff]
      %v1621 = vld [vmem:[%s271 + $0xb3] sm:$0xff]
      %v1622 = vld [vmem:[%s400 + $0x6] sm:$0x1]
      %v1623 = vlaneseq
      %v1624 = vshrl.u32 %v1623, 7
      %v1625 = vsub.s32 0, %v1624
      %v1626 = vrot.slane %v1622, %v1625
      %v1627 = vmul.f32 %v1614, %v1626
      %v1628 = vmul.f32 %v1615, %v1626
      %v1629 = vmul.f32 %v1616, %v1626
      %v1630 = vmul.f32 %v1617, %v1626
      %v1631 = vmul.f32 %v1618, %v1626
      %v1632 = vmul.f32 %v1619, %v1626
      %v1633 = vmul.f32 %v1620, %v1626
      %v1634 = vmul.f32 %v1621, %v1626
      %v1635 = vadd.f32 %v1606, %v1627
      %v1636 = vadd.f32 %v1607, %v1628
      %v1637 = vadd.f32 %v1608, %v1629
      %v1638 = vadd.f32 %v1609, %v1630
      %v1639 = vadd.f32 %v1610, %v1631
      %v1640 = vadd.f32 %v1611, %v1632
      %v1641 = vadd.f32 %v1612, %v1633
      %v1642 = vadd.f32 %v1613, %v1634
      %v1643 = vld [vmem:[%s274 + $0xb] sm:$0xff]
      %v1644 = vld [vmem:[%s274 + $0x23] sm:$0xff]
      %v1645 = vld [vmem:[%s274 + $0x3b] sm:$0xff]
      %v1646 = vld [vmem:[%s274 + $0x53] sm:$0xff]
      %v1647 = vld [vmem:[%s274 + $0x6b] sm:$0xff]
      %v1648 = vld [vmem:[%s274 + $0x83] sm:$0xff]
      %v1649 = vld [vmem:[%s274 + $0x9b] sm:$0xff]
      %v1650 = vld [vmem:[%s274 + $0xb3] sm:$0xff]
      %v1651 = vld [vmem:[%s430 + $0x6] sm:$0x1]
      %v1652 = vlaneseq
      %v1653 = vshrl.u32 %v1652, 7
      %v1654 = vsub.s32 0, %v1653
      %v1655 = vrot.slane %v1651, %v1654
      %v1656 = vmul.f32 %v1643, %v1655
      %v1657 = vmul.f32 %v1644, %v1655
      %v1658 = vmul.f32 %v1645, %v1655
      %v1659 = vmul.f32 %v1646, %v1655
      %v1660 = vmul.f32 %v1647, %v1655
      %v1661 = vmul.f32 %v1648, %v1655
      %v1662 = vmul.f32 %v1649, %v1655
      %v1663 = vmul.f32 %v1650, %v1655
      %v1664 = vadd.f32 %v1635, %v1656
      %v1665 = vadd.f32 %v1636, %v1657
      %v1666 = vadd.f32 %v1637, %v1658
      %v1667 = vadd.f32 %v1638, %v1659
      %v1668 = vadd.f32 %v1639, %v1660
      %v1669 = vadd.f32 %v1640, %v1661
      %v1670 = vadd.f32 %v1641, %v1662
      %v1671 = vadd.f32 %v1642, %v1663
      %v1672 = vld [vmem:[%s277 + $0xb] sm:$0xff]
      %v1673 = vld [vmem:[%s277 + $0x23] sm:$0xff]
      %v1674 = vld [vmem:[%s277 + $0x3b] sm:$0xff]
      %v1675 = vld [vmem:[%s277 + $0x53] sm:$0xff]
      %v1676 = vld [vmem:[%s277 + $0x6b] sm:$0xff]
      %v1677 = vld [vmem:[%s277 + $0x83] sm:$0xff]
      %v1678 = vld [vmem:[%s277 + $0x9b] sm:$0xff]
      %v1679 = vld [vmem:[%s277 + $0xb3] sm:$0xff]
      %v1680 = vld [vmem:[%s460 + $0x6] sm:$0x1]
      %v1681 = vlaneseq
      %v1682 = vshrl.u32 %v1681, 7
      %v1683 = vsub.s32 0, %v1682
      %v1684 = vrot.slane %v1680, %v1683
      %v1685 = vmul.f32 %v1672, %v1684
      %v1686 = vmul.f32 %v1673, %v1684
      %v1687 = vmul.f32 %v1674, %v1684
      %v1688 = vmul.f32 %v1675, %v1684
      %v1689 = vmul.f32 %v1676, %v1684
      %v1690 = vmul.f32 %v1677, %v1684
      %v1691 = vmul.f32 %v1678, %v1684
      %v1692 = vmul.f32 %v1679, %v1684
      %v1693 = vadd.f32 %v1664, %v1685
      %v1694 = vadd.f32 %v1665, %v1686
      %v1695 = vadd.f32 %v1666, %v1687
      %v1696 = vadd.f32 %v1667, %v1688
      %v1697 = vadd.f32 %v1668, %v1689
      %v1698 = vadd.f32 %v1669, %v1690
      %v1699 = vadd.f32 %v1670, %v1691
      %v1700 = vadd.f32 %v1671, %v1692
      %v1701 = vld [vmem:[%s280 + $0xb] sm:$0xff]
      %v1702 = vld [vmem:[%s280 + $0x23] sm:$0xff]
      %v1703 = vld [vmem:[%s280 + $0x3b] sm:$0xff]
      %v1704 = vld [vmem:[%s280 + $0x53] sm:$0xff]
      %v1705 = vld [vmem:[%s280 + $0x6b] sm:$0xff]
      %v1706 = vld [vmem:[%s280 + $0x83] sm:$0xff]
      %v1707 = vld [vmem:[%s280 + $0x9b] sm:$0xff]
      %v1708 = vld [vmem:[%s280 + $0xb3] sm:$0xff]
      %v1709 = vld [vmem:[%s490 + $0x6] sm:$0x1]
      %v1710 = vlaneseq
      %v1711 = vshrl.u32 %v1710, 7
      %v1712 = vsub.s32 0, %v1711
      %v1713 = vrot.slane %v1709, %v1712
      %v1714 = vmul.f32 %v1701, %v1713
      %v1715 = vmul.f32 %v1702, %v1713
      %v1716 = vmul.f32 %v1703, %v1713
      %v1717 = vmul.f32 %v1704, %v1713
      %v1718 = vmul.f32 %v1705, %v1713
      %v1719 = vmul.f32 %v1706, %v1713
      %v1720 = vmul.f32 %v1707, %v1713
      %v1721 = vmul.f32 %v1708, %v1713
      %v1722 = vadd.f32 %v1693, %v1714
      %v1723 = vadd.f32 %v1694, %v1715
      %v1724 = vadd.f32 %v1695, %v1716
      %v1725 = vadd.f32 %v1696, %v1717
      %v1726 = vadd.f32 %v1697, %v1718
      %v1727 = vadd.f32 %v1698, %v1719
      %v1728 = vadd.f32 %v1699, %v1720
      %v1729 = vadd.f32 %v1700, %v1721
      %1730 = vst [vmem:[%s232 + $0x2] sm:$0xff] %v1722
      %1731 = vst [vmem:[%s232 + $0xa] sm:$0xff] %v1723
      %1732 = vst [vmem:[%s232 + $0x12] sm:$0xff] %v1724
      %1733 = vst [vmem:[%s232 + $0x1a] sm:$0xff] %v1725
      %1734 = vst [vmem:[%s232 + $0x22] sm:$0xff] %v1726
      %1735 = vst [vmem:[%s232 + $0x2a] sm:$0xff] %v1727
      %1736 = vst [vmem:[%s232 + $0x32] sm:$0xff] %v1728
      %1737 = vst [vmem:[%s232 + $0x3a] sm:$0xff] %v1729
      %p1738 = scmp.lt.s32.totalorder %s18, 1
      %s1739 = scalar_select %p1738, %s18, 1
      %p1740 = scmp.lt.s32.totalorder %s19, 0
      %s1741 = scalar_select %p1740, %s19, 0
      %s1742 = smul.addr %s1739, 9
      %s1743 = sadd.s32 %s1741, %s1742
      %s1744 = smul.addr %s1743, 8
      %s1745 = scalar_lea.vmem %s3, %s1744
      // Predicated region
      $region33: #{tpu_custom_call.1} parent=31 // pred_check
        %p1746 = pneg %p126
      $region34: #{tpu_custom_call.1} parent=31 // pred_check_branch
        %1748 = sbr.rel (%p1746) target = $region36
      $region35: #{tpu_custom_call.1} parent=31 // pred_region
        _
      $region36: #{tpu_custom_call.1} parent=31 // pred_fallthru
        _
    $region32: #{tpu_custom_call.1} parent=5 // pred_fallthru
      _
    %p1749 = scmp.le.s32.totalorder 2, %s9
    // Predicated region
    $region37: #{tpu_custom_call.1} parent=5 // pred_check
      %p1750 = pneg %p1749
    $region38: #{tpu_custom_call.1} parent=5 // pred_check_branch
      %1752 = sbr.rel (%p1750) target = $region40
    $region39: #{tpu_custom_call.1} parent=5 // pred_region
      %s1753 = ssub.s32 %s9, 2
      // Predicated region
      $region41: #{tpu_custom_call.1} parent=39 // pred_check
        %p1754 = pneg %p132
      $region42: #{tpu_custom_call.1} parent=39 // pred_check_branch
        %1756 = sbr.rel (%p1754) target = $region44
      $region43: #{tpu_custom_call.1} parent=39 // pred_region
        %p1757 = scmp.lt.s32.totalorder %s20, 1
        %s1758 = scalar_select %p1757, %s20, 1
        %p1759 = scmp.lt.s32.totalorder %s21, 0
        %s1760 = scalar_select %p1759, %s21, 0
        %s1761 = smul.addr %s1758, 9
        %s1762 = sadd.s32 %s1760, %s1761
        %s1763 = smul.addr %s1762, 8
        %s1764 = scalar_lea.vmem %s3, %s1763
      $region44: #{tpu_custom_call.1} parent=39 // pred_fallthru
        _
    $region40: #{tpu_custom_call.1} parent=5 // pred_fallthru
      _
  $region6: #{tpu_custom_call.1} parent=0 // loop_footer
    %s13 = sadd.s32 1, %s9
  $region7: #{tpu_custom_call.1} parent=0 // loop_footer_branch
    %8 = sbr.rel target = $region3
  $region8: #{tpu_custom_call.1} parent=0 // loop_exit
    _

</llo_original>
